<compile_context>
chip_gen: v6e
topology: v6e:2x2x1
jax: 0.10.0
libtpu: 0.0.40
codegen_flags: <defaults>
</compile_context>

<pallas_src>
import functools

import jax
import jax.numpy as jnp
from jax.experimental import pallas as pl
from jax.experimental.pallas import tpu as pltpu


def _round_up(x, m):
    return (x + m - 1) // m * m


# ---------------------------------------------------------------------------
# Kernel 1: BN batch statistics (pass 0) + per-segment sum / max (pass 1).
# Grid (2, nt); both axes "arbitrary" -> strictly sequential, so pass 0
# publishes the fused BN (scale, shift) in bn_ref before pass 1 reads it.
# ---------------------------------------------------------------------------
def _stats_kernel(inp_ref, inpT_ref, w_ref, gamma_ref, beta_ref,
                  invc_ref, invr_ref, cnt_ref,
                  xg_ref, bn_ref,
                  s_ref, g_ref, segsum_ref, segmax_ref,
                  *, n_valid, eps, seg_chunk):
    p = pl.program_id(0)
    i = pl.program_id(1)
    nt = pl.num_programs(1)
    tn = inp_ref.shape[0]
    m_pad = xg_ref.shape[0]

    @pl.when(p == 0)
    def _bn_pass():
        # Input-moment accumulation: s = sum_rows(X), G = X^T X (in_ch x in_ch).
        # Padded rows are zero, so they add nothing; divide by the true N later.
        @pl.when(i == 0)
        def _():
            s_ref[...] = jnp.zeros_like(s_ref)
            g_ref[...] = jnp.zeros_like(g_ref)

        inp = inp_ref[...]
        s_ref[...] += jnp.sum(inp, axis=0, keepdims=True)
        g_ref[...] += jnp.dot(inpT_ref[...], inp, preferred_element_type=jnp.float32)

        @pl.when(i == nt - 1)
        def _():
            inv_n = 1.0 / float(n_valid)
            w = w_ref[...]
            mean = jnp.dot(s_ref[...], w, preferred_element_type=jnp.float32) * inv_n
            gw = jnp.dot(g_ref[...], w, preferred_element_type=jnp.float32)
            ex2 = jnp.sum(w * gw, axis=0, keepdims=True) * inv_n
            # NOTE: E[x^2] - mean^2 in f32 (fine for VFE-scale features).
            var = ex2 - mean * mean
            scale = gamma_ref[...] * jax.lax.rsqrt(var + eps)
            bn_ref[0:1, :] = scale
            bn_ref[1:2, :] = beta_ref[...] - mean * scale

    @pl.when(p == 1)
    def _seg_pass():
        @pl.when(i == 0)
        def _():
            segsum_ref[...] = jnp.zeros_like(segsum_ref)
            segmax_ref[...] = jnp.zeros_like(segmax_ref)

        # Recompute linear + fused BN + ReLU for this tile (cheap: K = in_ch).
        x = jnp.dot(inp_ref[...], w_ref[...], preferred_element_type=jnp.float32)
        x = jnp.maximum(x * bn_ref[0:1, :] + bn_ref[1:2, :], 0.0)          # (TN, C)

        # Per-segment sums via a standard-orientation one-hot MXU matmul.
        inv_row = invr_ref[...]                                            # (1, TN)
        onehot_mt = (jax.lax.broadcasted_iota(jnp.int32, (m_pad, tn), 0)
                     == inv_row).astype(jnp.float32)                       # (M_pad, TN)
        segsum_ref[...] += jnp.dot(onehot_mt, x, preferred_element_type=jnp.float32)

        # Running per-segment max, chunked over segments so the live masked temp is
        # (seg_chunk, TN, C) rather than (M, TN, C).  x >= 0 post-ReLU, so 0-masking
        # matches the reference (segments produced by unique() are non-empty).
        inv_col = invc_ref[...]                                            # (TN, 1)
        n_chunks = m_pad // seg_chunk

        def chunk_body(ci, carry):
            off = pl.multiple_of(ci * seg_chunk, seg_chunk)
            seg_ids = jax.lax.broadcasted_iota(jnp.int32, (seg_chunk, tn, 1), 0) + off
            hit = seg_ids == inv_col[None, :, :]                           # (MC, TN, 1)
            tile_max = jnp.max(jnp.where(hit, x[None, :, :], 0.0), axis=1)  # (MC, C)
            cur = segmax_ref[pl.ds(off, seg_chunk), :]
            segmax_ref[pl.ds(off, seg_chunk), :] = jnp.maximum(cur, tile_max)
            return carry

        jax.lax.fori_loop(0, n_chunks, chunk_body, None, unroll=min(n_chunks, 8))

        @pl.when(i == nt - 1)
        def _():
            x_mean = segsum_ref[...] / jnp.maximum(cnt_ref[...], 1.0)
            xg_ref[...] = segmax_ref[...] + x_mean                         # x_global


# ---------------------------------------------------------------------------
# Kernel 2: per-point output.  Processes even/odd row pairs so each store is a
# single lane-dense (TN/2, 4C = 128)-wide unmasked write.
# ---------------------------------------------------------------------------
def _output_kernel(inp_e_ref, inp_o_ref, w_ref, bn_ref, xg_ref,
                   inv_e_ref, inv_o_ref, out_ref):
    tn2 = inp_e_ref.shape[0]
    m_pad = xg_ref.shape[0]
    w = w_ref[...]
    scale = bn_ref[0:1, :]
    shift = bn_ref[1:2, :]
    xg = xg_ref[...]

    def feats(inp_ref, inv_ref):
        x = jnp.dot(inp_ref[...], w, preferred_element_type=jnp.float32)
        x = jnp.maximum(x * scale + shift, 0.0)                            # (TN2, C)
        onehot = (jax.lax.broadcasted_iota(jnp.int32, (tn2, m_pad), 1)
                  == inv_ref[...]).astype(jnp.float32)                     # (TN2, M_pad)
        g = jnp.dot(onehot, xg, preferred_element_type=jnp.float32)        # (TN2, C)
        return x, g

    x_e, g_e = feats(inp_e_ref, inv_e_ref)
    x_o, g_o = feats(inp_o_ref, inv_o_ref)
    # Row-pair packing: [x_even | g_even | x_odd | g_odd] -> 4C lanes (128 for C=32).
    out_ref[...] = jnp.concatenate([x_e, g_e, x_o, g_o], axis=1)


def _vmem_estimate_bytes(tn, in_ch, c, m_pad, seg_chunk):
    la = lambda d: _round_up(d, 128)
    su = lambda d: _round_up(d, 8)
    f = 4
    streams = 2 * f * (su(tn) * la(in_ch) + su(in_ch) * la(tn)
                       + su(tn) * la(1) + su(1) * la(tn))
    resident = f * (4 * su(m_pad) * la(c) + su(m_pad) * la(1)
                    + su(in_ch) * la(in_ch) + su(1) * la(in_ch) + 3 * su(2) * la(c))
    temps = f * (su(m_pad) * la(tn) + seg_chunk * su(tn) * la(c) + 3 * su(tn) * la(c))
    return streams + resident + temps


def pfn_layer_v1(inputs, unq_inv, weight, gamma, beta, num_segments, *,
                 tile_n=512, seg_chunk=128, eps=1e-3):
    """PFNLayerV1 forward (use_norm=True, last_layer=False).

    inputs: (N, in_ch) float; unq_inv: (N,) int pillar id per point;
    weight: (C, in_ch) nn.Linear layout with C = out_channels // 2;
    gamma/beta: (C,) BatchNorm1d affine params.  Returns (N, 2C).
    """
    n, in_ch = inputs.shape
    c = weight.shape[0]
    m = int(num_segments)
    f32 = jnp.float32

    # ---- segment padding / chunking (chunk bounds the masked-max temp) ----
    m8 = _round_up(max(m, 8), 8)
    if m8 <= seg_chunk:
        mc, m_pad = m8, m8
    else:
        mc = _round_up(seg_chunk, 8)
        m_pad = _round_up(m8, mc)

    # ---- row tiling: single tile if it fits, else multiples of 128 ----
    n8 = _round_up(max(n, 8), 8)
    if n8 <= tile_n:
        tn = n8
    else:
        tn = _round_up(tile_n, 128)
        # Re-derived VMEM budget (v7x: 64 MiB physical / 32 MiB scoped default).
        while tn > 128 and _vmem_estimate_bytes(tn, in_ch, c, m_pad, mc) > 40 * 2 ** 20:
            tn //= 2
    n_pad = _round_up(n, tn)
    nt = n_pad // tn
    vmem_limit = int(min(max(2 * _vmem_estimate_bytes(tn, in_ch, c, m_pad, mc),
                             32 * 2 ** 20), 64 * 2 ** 20))

    # ---- host-side packing (padded rows: zero features, segment id -1) ----
    inputs_p = jnp.zeros((n_pad, in_ch), f32).at[:n, :].set(inputs.astype(f32))
    inputs_t = inputs_p.T                                          # (in_ch, n_pad)
    inv_i = unq_inv.astype(jnp.int32)
    inv_col = jnp.full((n_pad, 1), -1, jnp.int32).at[:n, 0].set(inv_i)
    inv_row = inv_col.reshape(1, n_pad)
    counts = jnp.zeros((m_pad,), f32).at[inv_i].add(1.0).reshape(m_pad, 1)
    w_t = weight.astype(f32).T                                     # (in_ch, C)
    gamma2 = gamma.astype(f32).reshape(1, c)
    beta2 = beta.astype(f32).reshape(1, c)

    # ---- call 1: BN batch stats + per-segment stats (grid (2, nt), sequential) ----
    stats_fn = pl.pallas_call(
        functools.partial(_stats_kernel, n_valid=n, eps=eps, seg_chunk=mc),
        grid=(2, nt),
        in_specs=[
            pl.BlockSpec((tn, in_ch), lambda p, i: (i, 0)),             # inputs
            pl.BlockSpec((in_ch, tn), lambda p, i: (0, i * (1 - p))),   # inputs^T (pass 0 only)
            pl.BlockSpec((in_ch, c), lambda p, i: (0, 0)),              # weight^T (resident)
            pl.BlockSpec((1, c), lambda p, i: (0, 0)),                  # gamma
            pl.BlockSpec((1, c), lambda p, i: (0, 0)),                  # beta
            pl.BlockSpec((tn, 1), lambda p, i: (i * p, 0)),             # unq_inv col (pass 1)
            pl.BlockSpec((1, tn), lambda p, i: (0, i * p)),             # unq_inv row (pass 1)
            pl.BlockSpec((m_pad, 1), lambda p, i: (0, 0)),              # per-segment counts
        ],
        out_specs=[
            pl.BlockSpec((m_pad, c), lambda p, i: (0, 0)),              # x_global (resident)
            pl.BlockSpec((2, c), lambda p, i: (0, 0)),                  # [scale; shift]
        ],
        out_shape=[
            jax.ShapeDtypeStruct((m_pad, c), f32),
            jax.ShapeDtypeStruct((2, c), f32),
        ],
        scratch_shapes=[
            pltpu.VMEM((1, in_ch), f32),        # sum of input rows
            pltpu.VMEM((in_ch, in_ch), f32),    # input Gram matrix X^T X
            pltpu.VMEM((m_pad, c), f32),        # per-segment sum
            pltpu.VMEM((m_pad, c), f32),        # per-segment running max
        ],
        compiler_params=pltpu.CompilerParams(
            dimension_semantics=("arbitrary", "arbitrary"),
            vmem_limit_bytes=vmem_limit),
    )
    x_global, bn = stats_fn(inputs_p, inputs_t, w_t, gamma2, beta2,
                            inv_col, inv_row, counts)

    # ---- call 2: concat([x, x_global[unq_inv]]) with lane-dense pair-packed stores ----
    n2, tn2 = n_pad // 2, tn // 2
    out_fn = pl.pallas_call(
        _output_kernel,
        grid=(nt,),
        in_specs=[
            pl.BlockSpec((tn2, in_ch), lambda i: (i, 0)),   # even rows
            pl.BlockSpec((tn2, in_ch), lambda i: (i, 0)),   # odd rows
            pl.BlockSpec((in_ch, c), lambda i: (0, 0)),
            pl.BlockSpec((2, c), lambda i: (0, 0)),
            pl.BlockSpec((m_pad, c), lambda i: (0, 0)),
            pl.BlockSpec((tn2, 1), lambda i: (i, 0)),
            pl.BlockSpec((tn2, 1), lambda i: (i, 0)),
        ],
        out_specs=pl.BlockSpec((tn2, 4 * c), lambda i: (i, 0)),
        out_shape=jax.ShapeDtypeStruct((n2, 4 * c), f32),
        compiler_params=pltpu.CompilerParams(
            dimension_semantics=("parallel",),
            vmem_limit_bytes=vmem_limit),
    )
    out_packed = out_fn(inputs_p[0::2], inputs_p[1::2], w_t, bn, x_global,
                        inv_col[0::2], inv_col[1::2])
    # Row-major view back to (N, 2C): row 2r = lanes [:2C], row 2r+1 = lanes [2C:].
    return out_packed.reshape(n_pad, 2 * c)[:n]


def _reference(inputs, unq_inv, weight, gamma, beta, num_segments, eps=1e-3):
    x = inputs @ weight.T
    mu = jnp.mean(x, axis=0, keepdims=True)
    var = jnp.mean((x - mu) ** 2, axis=0, keepdims=True)
    x = (x - mu) * jax.lax.rsqrt(var + eps) * gamma[None, :] + beta[None, :]
    x = jnp.maximum(x, 0.0)
    seg_sum = jax.ops.segment_sum(x, unq_inv, num_segments=num_segments)
    counts = jax.ops.segment_sum(jnp.ones((x.shape[0],)), unq_inv, num_segments=num_segments)
    seg_max = jax.ops.segment_max(x, unq_inv, num_segments=num_segments)
    seg_max = jnp.where(counts[:, None] > 0, seg_max, 0.0)
    x_mean = seg_sum / jnp.maximum(counts, 1.0)[:, None]
    x_global = seg_max + x_mean
    return jnp.concatenate([x, x_global[unq_inv, :]], axis=1)


if __name__ == "__main__":
    key = jax.random.PRNGKey(0)
    N, IN_CH, OUT_CH, M = 64, 10, 64, 8      # PFNLayerV1(10, 64), not last layer => C = 32
    C = OUT_CH // 2

    k_in, k_w, k_g, k_b, k_inv = jax.random.split(key, 5)
    inputs = jax.random.normal(k_in, (N, IN_CH), dtype=jnp.float32)
    bound = 1.0 / (IN_CH ** 0.5)
    weight = jax.random.uniform(k_w, (C, IN_CH), dtype=jnp.float32, minval=-bound, maxval=bound)
    gamma = 1.0 + 0.1 * jax.random.normal(k_g, (C,), dtype=jnp.float32)
    beta = 0.1 * jax.random.normal(k_b, (C,), dtype=jnp.float32)
    unq_inv = jax.random.randint(k_inv, (N,), 0, M, dtype=jnp.int32)
    unq_inv = unq_inv.at[:M].set(jnp.arange(M, dtype=jnp.int32))  # all pillars present

    out = pfn_layer_v1(inputs, unq_inv, weight, gamma, beta, M)
    out = jax.block_until_ready(out)

    ref = _reference(inputs, unq_inv, weight, gamma, beta, M)
    assert out.shape == (N, OUT_CH), out.shape
    err = float(jnp.max(jnp.abs(out - ref)))
    assert err < 2e-3, f"max abs error {err}"

    print("KERNEL_OK")
</pallas_src>

<mosaic_0001>
module attributes {stable_mosaic.version = 11 : i64} {
  func.func @_stats_kernel(%arg0: i32, %arg1: i32, %arg2: memref<64x10xf32, #tpu.memory_space<vmem>>, %arg3: memref<10x64xf32, #tpu.memory_space<vmem>>, %arg4: memref<10x32xf32, #tpu.memory_space<vmem>>, %arg5: memref<1x32xf32, #tpu.memory_space<vmem>>, %arg6: memref<1x32xf32, #tpu.memory_space<vmem>>, %arg7: memref<64x1xi32, #tpu.memory_space<vmem>>, %arg8: memref<1x64xi32, #tpu.memory_space<vmem>>, %arg9: memref<8x1xf32, #tpu.memory_space<vmem>>, %arg10: memref<8x32xf32, #tpu.memory_space<vmem>>, %arg11: memref<2x32xf32, #tpu.memory_space<vmem>>, %arg12: memref<1x10xf32, #tpu.memory_space<vmem>>, %arg13: memref<10x10xf32, #tpu.memory_space<vmem>>, %arg14: memref<8x32xf32, #tpu.memory_space<vmem>>, %arg15: memref<8x32xf32, #tpu.memory_space<vmem>>) attributes {dimension_semantics = [#tpu.dimension_semantics<arbitrary>, #tpu.dimension_semantics<arbitrary>], iteration_bounds = array<i64: 2, 1>, scalar_prefetch = 0 : i64, scratch_operands = 4 : i64, tpu.core_type = #tpu.core_type<tc>, window_params = [{transform_indices = @transform_0, window_bounds = array<i64: 64, 10>}, {transform_indices = @transform_1, window_bounds = array<i64: 10, 64>}, {pipeline_mode = #tpu.pipeline_mode<synchronous>, transform_indices = @transform_2, window_bounds = array<i64: 10, 32>}, {pipeline_mode = #tpu.pipeline_mode<synchronous>, transform_indices = @transform_3, window_bounds = array<i64: 1, 32>}, {pipeline_mode = #tpu.pipeline_mode<synchronous>, transform_indices = @transform_4, window_bounds = array<i64: 1, 32>}, {transform_indices = @transform_5, window_bounds = array<i64: 64, 1>}, {transform_indices = @transform_6, window_bounds = array<i64: 1, 64>}, {pipeline_mode = #tpu.pipeline_mode<synchronous>, transform_indices = @transform_7, window_bounds = array<i64: 8, 1>}, {pipeline_mode = #tpu.pipeline_mode<synchronous>, transform_indices = @transform_8, window_bounds = array<i64: 8, 32>}, {pipeline_mode = #tpu.pipeline_mode<synchronous>, transform_indices = @transform_9, window_bounds = array<i64: 2, 32>}]} {
    %c0_i32 = arith.constant 0 : i32
    %0 = arith.cmpi eq, %arg0, %c0_i32 : i32
    %1 = arith.extui %0 : i1 to i32
    %c0_i32_0 = arith.constant 0 : i32
    %2 = arith.cmpi ne, %1, %c0_i32_0 : i32
    scf.if %2 {
      %c0_i32_2 = arith.constant 0 : i32
      %6 = arith.cmpi eq, %arg1, %c0_i32_2 : i32
      %7 = arith.extui %6 : i1 to i32
      %c0_i32_3 = arith.constant 0 : i32
      %8 = arith.cmpi ne, %7, %c0_i32_3 : i32
      scf.if %8 {
        %cst_18 = arith.constant 0.000000e+00 : f32
        %23 = vector.broadcast %cst_18 : f32 to vector<1x10xf32>
        %c0_19 = arith.constant 0 : index
        %c0_20 = arith.constant 0 : index
        %24 = vector.load %arg12[%c0_19, %c0_20] : memref<1x10xf32, #tpu.memory_space<vmem>>, vector<1x10xf32>
        tpu.vector_store %arg12[%c0_19, %c0_20], %23 {strides = array<i32>} : memref<1x10xf32, #tpu.memory_space<vmem>>, vector<1x10xf32>,
        %cst_21 = arith.constant 0.000000e+00 : f32
        %25 = vector.broadcast %cst_21 : f32 to vector<10x10xf32>
        %c0_22 = arith.constant 0 : index
        %c0_23 = arith.constant 0 : index
        %26 = vector.load %arg13[%c0_22, %c0_23] : memref<10x10xf32, #tpu.memory_space<vmem>>, vector<10x10xf32>
        tpu.vector_store %arg13[%c0_22, %c0_23], %25 {strides = array<i32>} : memref<10x10xf32, #tpu.memory_space<vmem>>, vector<10x10xf32>,
      } else {
      }
      %c0 = arith.constant 0 : index
      %c0_4 = arith.constant 0 : index
      %9 = vector.load %arg2[%c0, %c0_4] : memref<64x10xf32, #tpu.memory_space<vmem>>, vector<64x10xf32>
      %c0_5 = arith.constant 0 : index
      %c0_6 = arith.constant 0 : index
      %10 = vector.load %arg12[%c0_5, %c0_6] : memref<1x10xf32, #tpu.memory_space<vmem>>, vector<1x10xf32>
      %cst = arith.constant dense<0.000000e+00> : vector<10xf32>
      %11 = vector.multi_reduction <add>, %9, %cst [0] : vector<64x10xf32> to vector<10xf32>
      %12 = vector.shape_cast %11 : vector<10xf32> to vector<1x10xf32>
      %13 = arith.addf %10, %12 : vector<1x10xf32>
      %c0_7 = arith.constant 0 : index
      %c0_8 = arith.constant 0 : index
      %14 = vector.load %arg12[%c0_7, %c0_8] : memref<1x10xf32, #tpu.memory_space<vmem>>, vector<1x10xf32>
      tpu.vector_store %arg12[%c0_7, %c0_8], %13 {strides = array<i32>} : memref<1x10xf32, #tpu.memory_space<vmem>>, vector<1x10xf32>,
      %c0_9 = arith.constant 0 : index
      %c0_10 = arith.constant 0 : index
      %15 = vector.load %arg13[%c0_9, %c0_10] : memref<10x10xf32, #tpu.memory_space<vmem>>, vector<10x10xf32>
      %c0_11 = arith.constant 0 : index
      %c0_12 = arith.constant 0 : index
      %16 = vector.load %arg3[%c0_11, %c0_12] : memref<10x64xf32, #tpu.memory_space<vmem>>, vector<10x64xf32>
      %cst_13 = arith.constant dense<0.000000e+00> : vector<10x10xf32>
      %17 = tpu.matmul %16, %9, %cst_13 {dimension_numbers = #tpu.dot_dimension_numbers<[1], [0], [0], [1], [0, 0, 1, 1], [], []>} : vector<10x64xf32>, vector<64x10xf32>, vector<10x10xf32> -> vector<10x10xf32>
      %18 = arith.addf %15, %17 : vector<10x10xf32>
      %c0_14 = arith.constant 0 : index
      %c0_15 = arith.constant 0 : index
      %19 = vector.load %arg13[%c0_14, %c0_15] : memref<10x10xf32, #tpu.memory_space<vmem>>, vector<10x10xf32>
      tpu.vector_store %arg13[%c0_14, %c0_15], %18 {strides = array<i32>} : memref<10x10xf32, #tpu.memory_space<vmem>>, vector<10x10xf32>,
      %c0_i32_16 = arith.constant 0 : i32
      %20 = arith.cmpi eq, %arg1, %c0_i32_16 : i32
      %21 = arith.extui %20 : i1 to i32
      %c0_i32_17 = arith.constant 0 : i32
      %22 = arith.cmpi ne, %21, %c0_i32_17 : i32
      scf.if %22 {
        %c0_18 = arith.constant 0 : index
        %c0_19 = arith.constant 0 : index
        %23 = vector.load %arg4[%c0_18, %c0_19] : memref<10x32xf32, #tpu.memory_space<vmem>>, vector<10x32xf32>
        %c0_20 = arith.constant 0 : index
        %c0_21 = arith.constant 0 : index
        %24 = vector.load %arg12[%c0_20, %c0_21] : memref<1x10xf32, #tpu.memory_space<vmem>>, vector<1x10xf32>
        %cst_22 = arith.constant dense<0.000000e+00> : vector<1x32xf32>
        %25 = tpu.matmul %24, %23, %cst_22 {dimension_numbers = #tpu.dot_dimension_numbers<[1], [0], [0], [1], [0, 0, 1, 1], [], []>} : vector<1x10xf32>, vector<10x32xf32>, vector<1x32xf32> -> vector<1x32xf32>
        %cst_23 = arith.constant 1.562500e-02 : f32
        %26 = vector.broadcast %cst_23 : f32 to vector<1x32xf32>
        %27 = arith.mulf %25, %26 : vector<1x32xf32>
        %c0_24 = arith.constant 0 : index
        %c0_25 = arith.constant 0 : index
        %28 = vector.load %arg13[%c0_24, %c0_25] : memref<10x10xf32, #tpu.memory_space<vmem>>, vector<10x10xf32>
        %cst_26 = arith.constant dense<0.000000e+00> : vector<10x32xf32>
        %29 = tpu.matmul %28, %23, %cst_26 {dimension_numbers = #tpu.dot_dimension_numbers<[1], [0], [0], [1], [0, 0, 1, 1], [], []>} : vector<10x10xf32>, vector<10x32xf32>, vector<10x32xf32> -> vector<10x32xf32>
        %30 = arith.mulf %23, %29 : vector<10x32xf32>
        %cst_27 = arith.constant dense<0.000000e+00> : vector<32xf32>
        %31 = vector.multi_reduction <add>, %30, %cst_27 [0] : vector<10x32xf32> to vector<32xf32>
        %32 = vector.shape_cast %31 : vector<32xf32> to vector<1x32xf32>
        %cst_28 = arith.constant 1.562500e-02 : f32
        %33 = vector.broadcast %cst_28 : f32 to vector<1x32xf32>
        %34 = arith.mulf %32, %33 : vector<1x32xf32>
        %35 = arith.mulf %27, %27 : vector<1x32xf32>
        %36 = arith.subf %34, %35 : vector<1x32xf32>
        %c0_29 = arith.constant 0 : index
        %c0_30 = arith.constant 0 : index
        %37 = vector.load %arg5[%c0_29, %c0_30] : memref<1x32xf32, #tpu.memory_space<vmem>>, vector<1x32xf32>
        %cst_31 = arith.constant 1.000000e-03 : f32
        %38 = vector.broadcast %cst_31 : f32 to vector<1x32xf32>
        %39 = arith.addf %36, %38 : vector<1x32xf32>
        %40 = math.rsqrt %39 : vector<1x32xf32>
        %41 = arith.mulf %37, %40 : vector<1x32xf32>
        %c0_32 = arith.constant 0 : index
        %c0_33 = arith.constant 0 : index
        %42 = vector.load %arg11[%c0_32, %c0_33] : memref<2x32xf32, #tpu.memory_space<vmem>>, vector<1x32xf32>
        tpu.vector_store %arg11[%c0_32, %c0_33], %41 {strides = array<i32>} : memref<2x32xf32, #tpu.memory_space<vmem>>, vector<1x32xf32>,
        %c0_34 = arith.constant 0 : index
        %c0_35 = arith.constant 0 : index
        %43 = vector.load %arg6[%c0_34, %c0_35] : memref<1x32xf32, #tpu.memory_space<vmem>>, vector<1x32xf32>
        %44 = arith.mulf %27, %41 : vector<1x32xf32>
        %45 = arith.subf %43, %44 : vector<1x32xf32>
        %c1 = arith.constant 1 : index
        %c0_36 = arith.constant 0 : index
        %46 = vector.load %arg11[%c1, %c0_36] : memref<2x32xf32, #tpu.memory_space<vmem>>, vector<1x32xf32>
        tpu.vector_store %arg11[%c1, %c0_36], %45 {strides = array<i32>} : memref<2x32xf32, #tpu.memory_space<vmem>>, vector<1x32xf32>,
      } else {
      }
    } else {
    }
    %c1_i32 = arith.constant 1 : i32
    %3 = arith.cmpi eq, %arg0, %c1_i32 : i32
    %4 = arith.extui %3 : i1 to i32
    %c0_i32_1 = arith.constant 0 : i32
    %5 = arith.cmpi ne, %4, %c0_i32_1 : i32
    scf.if %5 {
      %c0_i32_2 = arith.constant 0 : i32
      %6 = arith.cmpi eq, %arg1, %c0_i32_2 : i32
      %7 = arith.extui %6 : i1 to i32
      %c0_i32_3 = arith.constant 0 : i32
      %8 = arith.cmpi ne, %7, %c0_i32_3 : i32
      scf.if %8 {
        %cst_28 = arith.constant 0.000000e+00 : f32
        %55 = vector.broadcast %cst_28 : f32 to vector<8x32xf32>
        %c0_29 = arith.constant 0 : index
        %c0_30 = arith.constant 0 : index
        %56 = vector.load %arg14[%c0_29, %c0_30] : memref<8x32xf32, #tpu.memory_space<vmem>>, vector<8x32xf32>
        tpu.vector_store %arg14[%c0_29, %c0_30], %55 {strides = array<i32>} : memref<8x32xf32, #tpu.memory_space<vmem>>, vector<8x32xf32>,
        %cst_31 = arith.constant 0.000000e+00 : f32
        %57 = vector.broadcast %cst_31 : f32 to vector<8x32xf32>
        %c0_32 = arith.constant 0 : index
        %c0_33 = arith.constant 0 : index
        %58 = vector.load %arg15[%c0_32, %c0_33] : memref<8x32xf32, #tpu.memory_space<vmem>>, vector<8x32xf32>
        tpu.vector_store %arg15[%c0_32, %c0_33], %57 {strides = array<i32>} : memref<8x32xf32, #tpu.memory_space<vmem>>, vector<8x32xf32>,
      } else {
      }
      %c0 = arith.constant 0 : index
      %c0_4 = arith.constant 0 : index
      %9 = vector.load %arg2[%c0, %c0_4] : memref<64x10xf32, #tpu.memory_space<vmem>>, vector<64x10xf32>
      %c0_5 = arith.constant 0 : index
      %c0_6 = arith.constant 0 : index
      %10 = vector.load %arg4[%c0_5, %c0_6] : memref<10x32xf32, #tpu.memory_space<vmem>>, vector<10x32xf32>
      %cst = arith.constant dense<0.000000e+00> : vector<64x32xf32>
      %11 = tpu.matmul %9, %10, %cst {dimension_numbers = #tpu.dot_dimension_numbers<[1], [0], [0], [1], [0, 0, 1, 1], [], []>} : vector<64x10xf32>, vector<10x32xf32>, vector<64x32xf32> -> vector<64x32xf32>
      %c0_7 = arith.constant 0 : index
      %c0_8 = arith.constant 0 : index
      %12 = vector.load %arg11[%c0_7, %c0_8] : memref<2x32xf32, #tpu.memory_space<vmem>>, vector<1x32xf32>
      %13 = vector.broadcast %12 : vector<1x32xf32> to vector<64x32xf32>
      %14 = arith.mulf %11, %13 : vector<64x32xf32>
      %c1 = arith.constant 1 : index
      %c0_9 = arith.constant 0 : index
      %15 = vector.load %arg11[%c1, %c0_9] : memref<2x32xf32, #tpu.memory_space<vmem>>, vector<1x32xf32>
      %16 = vector.broadcast %15 : vector<1x32xf32> to vector<64x32xf32>
      %17 = arith.addf %14, %16 : vector<64x32xf32>
      %cst_10 = arith.constant 0.000000e+00 : f32
      %18 = vector.broadcast %cst_10 : f32 to vector<64x32xf32>
      %19 = arith.maximumf %17, %18 : vector<64x32xf32>
      %c0_11 = arith.constant 0 : index
      %c0_12 = arith.constant 0 : index
      %20 = vector.load %arg8[%c0_11, %c0_12] : memref<1x64xi32, #tpu.memory_space<vmem>>, vector<1x64xi32>
      %21 = tpu.iota {dimensions = array<i32: 0>} : vector<8x64xi32>
      %22 = vector.broadcast %20 : vector<1x64xi32> to vector<8x64xi32>
      %23 = arith.cmpi eq, %21, %22 : vector<8x64xi32>
      %24 = arith.extui %23 : vector<8x64xi1> to vector<8x64xi32>
      %25 = arith.sitofp %24 : vector<8x64xi32> to vector<8x64xf32>
      %c0_13 = arith.constant 0 : index
      %c0_14 = arith.constant 0 : index
      %26 = vector.load %arg14[%c0_13, %c0_14] : memref<8x32xf32, #tpu.memory_space<vmem>>, vector<8x32xf32>
      %cst_15 = arith.constant dense<0.000000e+00> : vector<8x32xf32>
      %27 = tpu.matmul %25, %19, %cst_15 {dimension_numbers = #tpu.dot_dimension_numbers<[1], [0], [0], [1], [0, 0, 1, 1], [], []>} : vector<8x64xf32>, vector<64x32xf32>, vector<8x32xf32> -> vector<8x32xf32>
      %28 = arith.addf %26, %27 : vector<8x32xf32>
      %c0_16 = arith.constant 0 : index
      %c0_17 = arith.constant 0 : index
      %29 = vector.load %arg14[%c0_16, %c0_17] : memref<8x32xf32, #tpu.memory_space<vmem>>, vector<8x32xf32>
      tpu.vector_store %arg14[%c0_16, %c0_17], %28 {strides = array<i32>} : memref<8x32xf32, #tpu.memory_space<vmem>>, vector<8x32xf32>,
      %c0_18 = arith.constant 0 : index
      %c0_19 = arith.constant 0 : index
      %30 = vector.load %arg7[%c0_18, %c0_19] : memref<64x1xi32, #tpu.memory_space<vmem>>, vector<64x1xi32>
      %c0_i32_20 = arith.constant 0 : i32
      %c8_i32 = arith.constant 8 : i32
      %31 = arith.muli %c0_i32_20, %c8_i32 : i32
      %32 = tpu.assume_multiple %31, 8 : i32
      %33 = tpu.iota {dimensions = array<i32: 0>} : vector<8x64x1xi32>
      %34 = vector.broadcast %32 : i32 to vector<8x64x1xi32>
      %35 = arith.addi %33, %34 : vector<8x64x1xi32>
      %36 = vector.shape_cast %30 : vector<64x1xi32> to vector<1x64x1xi32>
      %37 = vector.broadcast %36 : vector<1x64x1xi32> to vector<8x64x1xi32>
      %38 = arith.cmpi eq, %35, %37 : vector<8x64x1xi32>
      %39 = vector.shape_cast %19 : vector<64x32xf32> to vector<1x64x32xf32>
      %cst_21 = arith.constant 0.000000e+00 : f32
      %40 = vector.shape_cast %38 : vector<8x64x1xi1> to vector<8x64x1xi1>
      %41 = vector.broadcast %40 : vector<8x64x1xi1> to vector<8x64x32xi1>
      %42 = vector.shape_cast %39 : vector<1x64x32xf32> to vector<1x64x32xf32>
      %43 = vector.broadcast %42 : vector<1x64x32xf32> to vector<8x64x32xf32>
      %44 = vector.broadcast %cst_21 : f32 to vector<8x64x32xf32>
      %45 = arith.select %41, %43, %44 : vector<8x64x32xi1>, vector<8x64x32xf32>
      %cst_22 = arith.constant dense<0xFF800000> : vector<8x32xf32>
      %46 = vector.multi_reduction <maximumf>, %45, %cst_22 [1] : vector<8x64x32xf32> to vector<8x32xf32>
      %47 = arith.index_cast %32 : i32 to index
      %c0_23 = arith.constant 0 : index
      %48 = vector.load %arg15[%47, %c0_23] : memref<8x32xf32, #tpu.memory_space<vmem>>, vector<8x32xf32>
      %49 = arith.maximumf %48, %46 : vector<8x32xf32>
      %50 = arith.index_cast %32 : i32 to index
      %c0_24 = arith.constant 0 : index
      %51 = vector.load %arg15[%50, %c0_24] : memref<8x32xf32, #tpu.memory_space<vmem>>, vector<8x32xf32>
      tpu.vector_store %arg15[%50, %c0_24], %49 {strides = array<i32>} : memref<8x32xf32, #tpu.memory_space<vmem>>, vector<8x32xf32>,
      %c1_i32_25 = arith.constant 1 : i32
      %c0_i32_26 = arith.constant 0 : i32
      %52 = arith.cmpi eq, %arg1, %c0_i32_26 : i32
      %53 = arith.extui %52 : i1 to i32
      %c0_i32_27 = arith.constant 0 : i32
      %54 = arith.cmpi ne, %53, %c0_i32_27 : i32
      scf.if %54 {
        %c0_28 = arith.constant 0 : index
        %c0_29 = arith.constant 0 : index
        %55 = vector.load %arg14[%c0_28, %c0_29] : memref<8x32xf32, #tpu.memory_space<vmem>>, vector<8x32xf32>
        %c0_30 = arith.constant 0 : index
        %c0_31 = arith.constant 0 : index
        %56 = vector.load %arg9[%c0_30, %c0_31] : memref<8x1xf32, #tpu.memory_space<vmem>>, vector<8x1xf32>
        %cst_32 = arith.constant 1.000000e+00 : f32
        %57 = vector.broadcast %cst_32 : f32 to vector<8x1xf32>
        %58 = arith.maximumf %56, %57 : vector<8x1xf32>
        %59 = vector.broadcast %58 : vector<8x1xf32> to vector<8x32xf32>
        %60 = arith.divf %55, %59 : vector<8x32xf32>
        %c0_33 = arith.constant 0 : index
        %c0_34 = arith.constant 0 : index
        %61 = vector.load %arg15[%c0_33, %c0_34] : memref<8x32xf32, #tpu.memory_space<vmem>>, vector<8x32xf32>
        %62 = arith.addf %61, %60 : vector<8x32xf32>
        %c0_35 = arith.constant 0 : index
        %c0_36 = arith.constant 0 : index
        %63 = vector.load %arg10[%c0_35, %c0_36] : memref<8x32xf32, #tpu.memory_space<vmem>>, vector<8x32xf32>
        tpu.vector_store %arg10[%c0_35, %c0_36], %62 {strides = array<i32>} : memref<8x32xf32, #tpu.memory_space<vmem>>, vector<8x32xf32>,
      } else {
      }
    } else {
    }
    return
  }
  func.func @transform_0(%arg0: i32, %arg1: i32) -> (i32, i32) {
    %c0_i32 = arith.constant 0 : i32
    %c0_i32_0 = arith.constant 0 : i32
    return %arg1, %c0_i32 : i32, i32
  }
  func.func @transform_1(%arg0: i32, %arg1: i32) -> (i32, i32) {
    %c1_i32 = arith.constant 1 : i32
    %0 = arith.subi %c1_i32, %arg0 : i32
    %1 = arith.muli %arg1, %0 : i32
    %c0_i32 = arith.constant 0 : i32
    %c0_i32_0 = arith.constant 0 : i32
    return %c0_i32, %1 : i32, i32
  }
  func.func @transform_2(%arg0: i32, %arg1: i32) -> (i32, i32) {
    %c0_i32 = arith.constant 0 : i32
    %c0_i32_0 = arith.constant 0 : i32
    %c0_i32_1 = arith.constant 0 : i32
    return %c0_i32, %c0_i32_0 : i32, i32
  }
  func.func @transform_3(%arg0: i32, %arg1: i32) -> (i32, i32) {
    %c0_i32 = arith.constant 0 : i32
    %c0_i32_0 = arith.constant 0 : i32
    %c0_i32_1 = arith.constant 0 : i32
    return %c0_i32, %c0_i32_0 : i32, i32
  }
  func.func @transform_4(%arg0: i32, %arg1: i32) -> (i32, i32) {
    %c0_i32 = arith.constant 0 : i32
    %c0_i32_0 = arith.constant 0 : i32
    %c0_i32_1 = arith.constant 0 : i32
    return %c0_i32, %c0_i32_0 : i32, i32
  }
  func.func @transform_5(%arg0: i32, %arg1: i32) -> (i32, i32) {
    %0 = arith.muli %arg1, %arg0 : i32
    %c0_i32 = arith.constant 0 : i32
    %c0_i32_0 = arith.constant 0 : i32
    return %0, %c0_i32 : i32, i32
  }
  func.func @transform_6(%arg0: i32, %arg1: i32) -> (i32, i32) {
    %0 = arith.muli %arg1, %arg0 : i32
    %c0_i32 = arith.constant 0 : i32
    %c0_i32_0 = arith.constant 0 : i32
    return %c0_i32, %0 : i32, i32
  }
  func.func @transform_7(%arg0: i32, %arg1: i32) -> (i32, i32) {
    %c0_i32 = arith.constant 0 : i32
    %c0_i32_0 = arith.constant 0 : i32
    %c0_i32_1 = arith.constant 0 : i32
    return %c0_i32, %c0_i32_0 : i32, i32
  }
  func.func @transform_8(%arg0: i32, %arg1: i32) -> (i32, i32) {
    %c0_i32 = arith.constant 0 : i32
    %c0_i32_0 = arith.constant 0 : i32
    %c0_i32_1 = arith.constant 0 : i32
    return %c0_i32, %c0_i32_0 : i32, i32
  }
  func.func @transform_9(%arg0: i32, %arg1: i32) -> (i32, i32) {
    %c0_i32 = arith.constant 0 : i32
    %c0_i32_0 = arith.constant 0 : i32
    %c0_i32_1 = arith.constant 0 : i32
    return %c0_i32, %c0_i32_0 : i32, i32
  }
}

</mosaic_0001>

<llo_original>
// kernel: tpu_custom_call.1
$region0: #{tpu_custom_call.1}
  #allocation0 [shape = 'u32[]', space=smem, size = 0x4, offset = 0x4, fixed_abs, tag = 'smem constant byte address 0x4 - core index']
  #allocation1 [shape = 'u32[144,128]{1,0:T(1,128)}', space=vmem, size = 0x12000, scoped, tag = 'internal scratch']
  #allocation2 [shape = 'f32[1,10]{1,0:T(1,128)}', space=vmem, size = 0x200, scoped, tag = 'scratch operand']
  #allocation3 [shape = 'f32[10,10]{1,0:T(8,128)}', space=vmem, size = 0x2000, scoped, tag = 'scratch operand']
  #allocation4 [shape = 'f32[8,32]{1,0:T(8,128)}', space=vmem, size = 0x1000, scoped, tag = 'scratch operand']
  #allocation5 [shape = 'f32[8,32]{1,0:T(8,128)}', space=vmem, size = 0x1000, scoped, tag = 'scratch operand']
  %s0 = inlined_call_operand.vmem [shape: f32[64,10], index: 0, kind: input, shape index: {}]
  %s1 = inlined_call_operand.vmem [shape: f32[10,64], index: 1, kind: input, shape index: {}]
  %s2 = inlined_call_operand.vmem [shape: f32[10,32], index: 2, kind: input, shape index: {}]
  %s3 = inlined_call_operand.vmem [shape: f32[1,32], index: 3, kind: input, shape index: {}]
  %s4 = inlined_call_operand.vmem [shape: f32[1,32], index: 4, kind: input, shape index: {}]
  %s5 = inlined_call_operand.vmem [shape: s32[64,1], index: 5, kind: input, shape index: {}]
  %s6 = inlined_call_operand.vmem [shape: s32[1,64], index: 6, kind: input, shape index: {}]
  %s7 = inlined_call_operand.vmem [shape: f32[8,1], index: 7, kind: input, shape index: {}]
  %s8 = inlined_call_operand.hbm [shape: f32[8,32], index: 8, kind: output, shape index: {0}]
  %s9 = inlined_call_operand.hbm [shape: f32[2,32], index: 9, kind: output, shape index: {1}]
  %10 = xla_tuple %s8, %s9
  %s11 = sld [smem:[#allocation0]]
  $region97: #{tpu_custom_call.1} parent=0
    _
  %s13 = ssub.s32 1, %s11
  %s14 = scalar_select 0, %s13, %s11
  $region1: #{tpu_custom_call.1} parent=0
    #allocation6 [shape = 'u8[4096]{0}', space=vmem, size = 0x1000, scoped, tag = 'output window, operand 0, single buffered']
    #allocation7 [shape = 's32[2]{0}', space=sflag, size = 0x8, scoped, tag = 'scoped memory for tpu_custom_call.1']
    #allocation8 [shape = 'u8[1024]{0}', space=vmem, size = 0x400, scoped, tag = 'output window, operand 1, single buffered']
    #allocation9 [shape = 's32[1]{0}', space=sflag, size = 0x4, scoped, tag = 'scoped memory for tpu_custom_call.1']
    %15 = vsyncpa [#allocation7], 0
    %16 = vsyncpa [#allocation9], 0
    loop: start=0, step=1, limit=4
    $region2: #{tpu_custom_call.1} parent=1 // loop_pre_header
      _
    $region3: #{tpu_custom_call.1} parent=1 // loop_header
      %s18 = sphi 0, %s22
      %p19 = scmp.ge.s32.totalorder %s18, 4
      %s25 = sphi 0, %s37
      %s26 = sphi 0, %s33
      %s27 = sphi 0, %s25
      %s28 = sphi 0, %s26
      %s29 = sphi 0, %s27
      %s30 = sphi 0, %s28
      %s40 = sphi 0, %s42
      %s43 = sphi 0, %s40
      %s44 = sphi 0, %s43
      %s60 = sphi 0, %s44
      %s70 = sphi 0, %s72
      %s73 = sphi 0, %s70
      %s74 = sphi 0, %s73
      %s90 = sphi 0, %s74
      %s94 = sphi 0, %s94
      %s96 = sphi 0, %s94
      %s97 = sphi 0, %s96
      %s111 = sphi 0, %s97
      %s115 = sphi 0, %s115
      %s117 = sphi 0, %s115
      %s118 = sphi 0, %s117
      %s132 = sphi 0, %s118
      %s136 = sphi 0, %s136
      %s138 = sphi 0, %s136
      %s139 = sphi 0, %s138
      %s153 = sphi 0, %s139
      %s161 = sphi 0, %s163
      %s164 = sphi 0, %s161
      %s165 = sphi 0, %s164
      %s181 = sphi 0, %s165
      %s189 = sphi 0, %s191
      %s192 = sphi 0, %s189
      %s193 = sphi 0, %s192
      %s209 = sphi 0, %s193
      %s213 = sphi 0, %s213
      %s215 = sphi 0, %s213
      %s216 = sphi 0, %s215
      %s230 = sphi 0, %s216
      %s234 = sphi 0, %s234
      %s236 = sphi 0, %s234
      %s237 = sphi 0, %s236
      %s251 = sphi 0, %s237
      %s255 = sphi 0, %s255
      %s257 = sphi 0, %s255
      %s258 = sphi 0, %s257
      %s272 = sphi 0, %s258
    $region4: #{tpu_custom_call.1} parent=1 // loop_header_branch
      %21 = sbr.rel (%p19) target = $region8
    $region5: #{tpu_custom_call.1} parent=1 // loop_body
      %s23 = ssub.s32 %s18, 1
      %s24 = ssub.s32 %s18, 2
      %s31 = sadd.s32 1, %s26
      %p32 = scmp.ge.s32.totalorder %s31, 1
      %s33 = scalar_select %p32, 0, %s31
      %s34 = sadd.s32 1, %s25
      %s35 = scalar_select %p32, %s34, %s25
      %p36 = scmp.ge.s32.totalorder %s35, 2
      %s37 = scalar_select %p36, 0, %s35
      %s38 = ssub.s32 %s26, %s33
      %p39 = scmp.eq.s32.totalorder %s38, 0
      %s41 = sadd.s32 %s40, 1
      %s42 = scalar_select %p39, %s40, %s41
      %p45 = pneg %p39
      %p46 = scmp.eq.s32.totalorder %s18, 1
      %p47 = por %p45, %p46
      %p48 = scmp.ne.s32.totalorder %s40, %s43
      %p49 = scmp.eq.s32.totalorder %s18, 0
      %p50 = por %p48, %p49
      %p51 = scmp.ne.s32.totalorder %s40, %s43
      %p52 = scmp.eq.s32.totalorder %s23, 1
      %p53 = por %p51, %p52
      %p54 = scmp.ne.s32.totalorder %s43, %s44
      %p55 = scmp.eq.s32.totalorder %s23, 0
      %p56 = por %p54, %p55
      %p57 = scmp.ne.s32.totalorder %s43, %s44
      %p58 = scmp.eq.s32.totalorder %s24, 1
      %p59 = por %p57, %p58
      %p61 = scmp.ne.s32.totalorder %s44, %s60
      %p62 = scmp.eq.s32.totalorder %s24, 0
      %p63 = por %p61, %p62
      %s64 = ssub.s32 1, %s25
      %s65 = smul.u32 %s26, %s64
      %s66 = ssub.s32 1, %s37
      %s67 = smul.u32 %s33, %s66
      %s68 = ssub.s32 %s65, %s67
      %p69 = scmp.eq.s32.totalorder %s68, 0
      %s71 = sadd.s32 %s70, 1
      %s72 = scalar_select %p69, %s70, %s71
      %p75 = pneg %p69
      %p76 = scmp.eq.s32.totalorder %s18, 1
      %p77 = por %p75, %p76
      %p78 = scmp.ne.s32.totalorder %s70, %s73
      %p79 = scmp.eq.s32.totalorder %s18, 0
      %p80 = por %p78, %p79
      %p81 = scmp.ne.s32.totalorder %s70, %s73
      %p82 = scmp.eq.s32.totalorder %s23, 1
      %p83 = por %p81, %p82
      %p84 = scmp.ne.s32.totalorder %s73, %s74
      %p85 = scmp.eq.s32.totalorder %s23, 0
      %p86 = por %p84, %p85
      %p87 = scmp.ne.s32.totalorder %s73, %s74
      %p88 = scmp.eq.s32.totalorder %s24, 1
      %p89 = por %p87, %p88
      %p91 = scmp.ne.s32.totalorder %s74, %s90
      %p92 = scmp.eq.s32.totalorder %s24, 0
      %p93 = por %p91, %p92
      %s95 = sadd.s32 %s94, 1
      %p98 = scmp.eq.s32.totalorder %s18, 1
      %p99 = scmp.ne.s32.totalorder %s94, %s96
      %p100 = scmp.eq.s32.totalorder %s18, 0
      %p101 = por %p99, %p100
      %p102 = scmp.ne.s32.totalorder %s94, %s96
      %p103 = scmp.eq.s32.totalorder %s23, 1
      %p104 = por %p102, %p103
      %p105 = scmp.ne.s32.totalorder %s96, %s97
      %p106 = scmp.eq.s32.totalorder %s23, 0
      %p107 = por %p105, %p106
      %p108 = scmp.ne.s32.totalorder %s96, %s97
      %p109 = scmp.eq.s32.totalorder %s24, 1
      %p110 = por %p108, %p109
      %p112 = scmp.ne.s32.totalorder %s97, %s111
      %p113 = scmp.eq.s32.totalorder %s24, 0
      %p114 = por %p112, %p113
      %s116 = sadd.s32 %s115, 1
      %p119 = scmp.eq.s32.totalorder %s18, 1
      %p120 = scmp.ne.s32.totalorder %s115, %s117
      %p121 = scmp.eq.s32.totalorder %s18, 0
      %p122 = por %p120, %p121
      %p123 = scmp.ne.s32.totalorder %s115, %s117
      %p124 = scmp.eq.s32.totalorder %s23, 1
      %p125 = por %p123, %p124
      %p126 = scmp.ne.s32.totalorder %s117, %s118
      %p127 = scmp.eq.s32.totalorder %s23, 0
      %p128 = por %p126, %p127
      %p129 = scmp.ne.s32.totalorder %s117, %s118
      %p130 = scmp.eq.s32.totalorder %s24, 1
      %p131 = por %p129, %p130
      %p133 = scmp.ne.s32.totalorder %s118, %s132
      %p134 = scmp.eq.s32.totalorder %s24, 0
      %p135 = por %p133, %p134
      %s137 = sadd.s32 %s136, 1
      %p140 = scmp.eq.s32.totalorder %s18, 1
      %p141 = scmp.ne.s32.totalorder %s136, %s138
      %p142 = scmp.eq.s32.totalorder %s18, 0
      %p143 = por %p141, %p142
      %p144 = scmp.ne.s32.totalorder %s136, %s138
      %p145 = scmp.eq.s32.totalorder %s23, 1
      %p146 = por %p144, %p145
      %p147 = scmp.ne.s32.totalorder %s138, %s139
      %p148 = scmp.eq.s32.totalorder %s23, 0
      %p149 = por %p147, %p148
      %p150 = scmp.ne.s32.totalorder %s138, %s139
      %p151 = scmp.eq.s32.totalorder %s24, 1
      %p152 = por %p150, %p151
      %p154 = scmp.ne.s32.totalorder %s139, %s153
      %p155 = scmp.eq.s32.totalorder %s24, 0
      %p156 = por %p154, %p155
      %s157 = smul.u32 %s26, %s25
      %s158 = smul.u32 %s33, %s37
      %s159 = ssub.s32 %s157, %s158
      %p160 = scmp.eq.s32.totalorder %s159, 0
      %s162 = sadd.s32 %s161, 1
      %s163 = scalar_select %p160, %s161, %s162
      %p166 = pneg %p160
      %p167 = scmp.eq.s32.totalorder %s18, 1
      %p168 = por %p166, %p167
      %p169 = scmp.ne.s32.totalorder %s161, %s164
      %p170 = scmp.eq.s32.totalorder %s18, 0
      %p171 = por %p169, %p170
      %p172 = scmp.ne.s32.totalorder %s161, %s164
      %p173 = scmp.eq.s32.totalorder %s23, 1
      %p174 = por %p172, %p173
      %p175 = scmp.ne.s32.totalorder %s164, %s165
      %p176 = scmp.eq.s32.totalorder %s23, 0
      %p177 = por %p175, %p176
      %p178 = scmp.ne.s32.totalorder %s164, %s165
      %p179 = scmp.eq.s32.totalorder %s24, 1
      %p180 = por %p178, %p179
      %p182 = scmp.ne.s32.totalorder %s165, %s181
      %p183 = scmp.eq.s32.totalorder %s24, 0
      %p184 = por %p182, %p183
      %s185 = smul.u32 %s26, %s25
      %s186 = smul.u32 %s33, %s37
      %s187 = ssub.s32 %s185, %s186
      %p188 = scmp.eq.s32.totalorder %s187, 0
      %s190 = sadd.s32 %s189, 1
      %s191 = scalar_select %p188, %s189, %s190
      %p194 = pneg %p188
      %p195 = scmp.eq.s32.totalorder %s18, 1
      %p196 = por %p194, %p195
      %p197 = scmp.ne.s32.totalorder %s189, %s192
      %p198 = scmp.eq.s32.totalorder %s18, 0
      %p199 = por %p197, %p198
      %p200 = scmp.ne.s32.totalorder %s189, %s192
      %p201 = scmp.eq.s32.totalorder %s23, 1
      %p202 = por %p200, %p201
      %p203 = scmp.ne.s32.totalorder %s192, %s193
      %p204 = scmp.eq.s32.totalorder %s23, 0
      %p205 = por %p203, %p204
      %p206 = scmp.ne.s32.totalorder %s192, %s193
      %p207 = scmp.eq.s32.totalorder %s24, 1
      %p208 = por %p206, %p207
      %p210 = scmp.ne.s32.totalorder %s193, %s209
      %p211 = scmp.eq.s32.totalorder %s24, 0
      %p212 = por %p210, %p211
      %s214 = sadd.s32 %s213, 1
      %p217 = scmp.eq.s32.totalorder %s18, 1
      %p218 = scmp.ne.s32.totalorder %s213, %s215
      %p219 = scmp.eq.s32.totalorder %s18, 0
      %p220 = por %p218, %p219
      %p221 = scmp.ne.s32.totalorder %s213, %s215
      %p222 = scmp.eq.s32.totalorder %s23, 1
      %p223 = por %p221, %p222
      %p224 = scmp.ne.s32.totalorder %s215, %s216
      %p225 = scmp.eq.s32.totalorder %s23, 0
      %p226 = por %p224, %p225
      %p227 = scmp.ne.s32.totalorder %s215, %s216
      %p228 = scmp.eq.s32.totalorder %s24, 1
      %p229 = por %p227, %p228
      %p231 = scmp.ne.s32.totalorder %s216, %s230
      %p232 = scmp.eq.s32.totalorder %s24, 0
      %p233 = por %p231, %p232
      %s235 = sadd.s32 %s234, 1
      %p238 = scmp.eq.s32.totalorder %s18, 1
      %p239 = scmp.ne.s32.totalorder %s234, %s236
      %p240 = scmp.eq.s32.totalorder %s18, 0
      %p241 = por %p239, %p240
      %p242 = scmp.ne.s32.totalorder %s234, %s236
      %p243 = scmp.eq.s32.totalorder %s23, 1
      %p244 = por %p242, %p243
      %p245 = scmp.ne.s32.totalorder %s236, %s237
      %p246 = scmp.eq.s32.totalorder %s23, 0
      %p247 = por %p245, %p246
      %p248 = scmp.ne.s32.totalorder %s236, %s237
      %p249 = scmp.eq.s32.totalorder %s24, 1
      %p250 = por %p248, %p249
      %p252 = scmp.ne.s32.totalorder %s237, %s251
      %p253 = scmp.eq.s32.totalorder %s24, 0
      %p254 = por %p252, %p253
      %s256 = sadd.s32 %s255, 1
      %p259 = scmp.eq.s32.totalorder %s18, 1
      %p260 = scmp.ne.s32.totalorder %s255, %s257
      %p261 = scmp.eq.s32.totalorder %s18, 0
      %p262 = por %p260, %p261
      %p263 = scmp.ne.s32.totalorder %s255, %s257
      %p264 = scmp.eq.s32.totalorder %s23, 1
      %p265 = por %p263, %p264
      %p266 = scmp.ne.s32.totalorder %s257, %s258
      %p267 = scmp.eq.s32.totalorder %s23, 0
      %p268 = por %p266, %p267
      %p269 = scmp.ne.s32.totalorder %s257, %s258
      %p270 = scmp.eq.s32.totalorder %s24, 1
      %p271 = por %p269, %p270
      %p273 = scmp.ne.s32.totalorder %s258, %s272
      %p274 = scmp.eq.s32.totalorder %s24, 0
      %p275 = por %p273, %p274
      %p276 = scmp.le.s32.totalorder 1, %s18
      %p277 = scmp.lt.s32.totalorder %s18, 3
      %p278 = pnand %p276, %p277
      %p279 = pneg %p278
      // Predicated region
      $region9: #{tpu_custom_call.1} parent=5 // pred_check
        _
      $region10: #{tpu_custom_call.1} parent=5 // pred_check_branch
        %281 = sbr.rel (%p278) target = $region12
      $region11: #{tpu_custom_call.1} parent=5 // pred_region
        %s282 = ssub.s32 %s18, 1
        // Predicated region
        $region13: #{tpu_custom_call.1} parent=11 // pred_check
          %p283 = pneg %p56
        $region14: #{tpu_custom_call.1} parent=11 // pred_check_branch
          %285 = sbr.rel (%p283) target = $region16
        $region15: #{tpu_custom_call.1} parent=11 // pred_region
          %s286 = smul.u32 8, %s28
          %p287 = scmp.lt.s32.totalorder %s286, 7
          %s288 = scalar_select %p287, %s286, 7
          %s289 = smul.addr %s288, 8
          %s290 = scalar_lea.vmem %s0, %s289
          %s291 = smul.u32 8, %s28
        $region16: #{tpu_custom_call.1} parent=11 // pred_fallthru
          _
        // Predicated region
        $region17: #{tpu_custom_call.1} parent=11 // pred_check
          %p292 = pneg %p107
        $region18: #{tpu_custom_call.1} parent=11 // pred_check_branch
          %294 = sbr.rel (%p292) target = $region20
        $region19: #{tpu_custom_call.1} parent=11 // pred_region
          _
        $region20: #{tpu_custom_call.1} parent=11 // pred_fallthru
          _
        // Predicated region
        $region21: #{tpu_custom_call.1} parent=11 // pred_check
          %p295 = pneg %p128
        $region22: #{tpu_custom_call.1} parent=11 // pred_check_branch
          %297 = sbr.rel (%p295) target = $region24
        $region23: #{tpu_custom_call.1} parent=11 // pred_region
          _
        $region24: #{tpu_custom_call.1} parent=11 // pred_fallthru
          _
        // Predicated region
        $region25: #{tpu_custom_call.1} parent=11 // pred_check
          %p298 = pneg %p149
        $region26: #{tpu_custom_call.1} parent=11 // pred_check_branch
          %300 = sbr.rel (%p298) target = $region28
        $region27: #{tpu_custom_call.1} parent=11 // pred_region
          _
        $region28: #{tpu_custom_call.1} parent=11 // pred_fallthru
          _
        // Predicated region
        $region29: #{tpu_custom_call.1} parent=11 // pred_check
          %p301 = pneg %p226
        $region30: #{tpu_custom_call.1} parent=11 // pred_check_branch
          %303 = sbr.rel (%p301) target = $region32
        $region31: #{tpu_custom_call.1} parent=11 // pred_region
          _
        $region32: #{tpu_custom_call.1} parent=11 // pred_fallthru
          _
      $region12: #{tpu_custom_call.1} parent=5 // pred_fallthru
        _
      %p304 = scmp.lt.s32.totalorder %s18, 2
      // Predicated region
      $region33: #{tpu_custom_call.1} parent=5 // pred_check
        %p305 = pneg %p304
      $region34: #{tpu_custom_call.1} parent=5 // pred_check_branch
        %307 = sbr.rel (%p305) target = $region36
      $region35: #{tpu_custom_call.1} parent=5 // pred_region
        // Predicated region
        $region37: #{tpu_custom_call.1} parent=35 // pred_check
          %p308 = pneg %p80
        $region38: #{tpu_custom_call.1} parent=35 // pred_check_branch
          %310 = sbr.rel (%p308) target = $region40
        $region39: #{tpu_custom_call.1} parent=35 // pred_region
          %s311 = ssub.s32 1, %s25
          %s312 = smul.u32 %s26, %s311
          %p313 = scmp.lt.s32.totalorder %s312, 0
          %s314 = scalar_select %p313, %s312, 0
          %s315 = smul.addr %s314, 8
          %s316 = scalar_lea.vmem %s1, %s315
          %s317 = ssub.s32 1, %s25
          %s318 = smul.u32 %s26, %s317
        $region40: #{tpu_custom_call.1} parent=35 // pred_fallthru
          _
        // Predicated region
        $region41: #{tpu_custom_call.1} parent=35 // pred_check
          %p319 = pneg %p171
        $region42: #{tpu_custom_call.1} parent=35 // pred_check_branch
          %321 = sbr.rel (%p319) target = $region44
        $region43: #{tpu_custom_call.1} parent=35 // pred_region
          %s322 = smul.u32 %s26, %s25
          %s323 = smul.u32 8, %s322
          %p324 = scmp.lt.s32.totalorder %s323, 7
          %s325 = scalar_select %p324, %s323, 7
          %s326 = smul.addr %s325, 8
          %s327 = scalar_lea.vmem %s5, %s326
          %s328 = smul.u32 %s26, %s25
          %s329 = smul.u32 8, %s328
        $region44: #{tpu_custom_call.1} parent=35 // pred_fallthru
          _
        // Predicated region
        $region45: #{tpu_custom_call.1} parent=35 // pred_check
          %p330 = pneg %p199
        $region46: #{tpu_custom_call.1} parent=35 // pred_check_branch
          %332 = sbr.rel (%p330) target = $region48
        $region47: #{tpu_custom_call.1} parent=35 // pred_region
          %s333 = smul.u32 %s26, %s25
          %p334 = scmp.lt.s32.totalorder %s333, 0
          %s335 = scalar_select %p334, %s333, 0
          %s336 = scalar_lea.vmem %s6, %s335
          %s337 = smul.u32 %s26, %s25
        $region48: #{tpu_custom_call.1} parent=35 // pred_fallthru
          _
      $region36: #{tpu_custom_call.1} parent=5 // pred_fallthru
        _
      %p338 = scmp.le.s32.totalorder 1, %s18
      %p339 = scmp.lt.s32.totalorder %s18, 3
      %p340 = pnand %p338, %p339
      %p341 = pneg %p340
      // Predicated region
      $region49: #{tpu_custom_call.1} parent=5 // pred_check
        _
      $region50: #{tpu_custom_call.1} parent=5 // pred_check_branch
        %343 = sbr.rel (%p340) target = $region52
      $region51: #{tpu_custom_call.1} parent=5 // pred_region
        %s344 = ssub.s32 %s18, 1
        %s345 = smul.u32 8, %s28
        %p346 = scmp.lt.s32.totalorder %s345, 7
        %s347 = scalar_select %p346, %s345, 7
        %s348 = smul.addr %s347, 8
        %s349 = scalar_lea.vmem %s0, %s348
        %p350 = pneg %p56
        %p351 = pneg %p53
        %s352 = ssub.s32 1, %s27
        %s353 = smul.u32 %s28, %s352
        %p354 = scmp.lt.s32.totalorder %s353, 0
        %s355 = scalar_select %p354, %s353, 0
        %s356 = smul.addr %s355, 8
        %s357 = scalar_lea.vmem %s1, %s356
        %p358 = pneg %p86
        %p359 = pneg %p83
        %p360 = pneg %p107
        %p361 = pneg %p104
        %p362 = pneg %p128
        %p363 = pneg %p125
        %p364 = pneg %p149
        %p365 = pneg %p146
        %s366 = smul.u32 %s28, %s27
        %s367 = smul.u32 8, %s366
        %p368 = scmp.lt.s32.totalorder %s367, 7
        %s369 = scalar_select %p368, %s367, 7
        %s370 = smul.addr %s369, 8
        %s371 = scalar_lea.vmem %s5, %s370
        %p372 = pneg %p177
        %p373 = pneg %p174
        %s374 = smul.u32 %s28, %s27
        %p375 = scmp.lt.s32.totalorder %s374, 0
        %s376 = scalar_select %p375, %s374, 0
        %s377 = scalar_lea.vmem %s6, %s376
        %p378 = pneg %p205
        %p379 = pneg %p202
        %p380 = pneg %p226
        %p381 = pneg %p223
        %p382 = pneg %p247
        %p383 = pneg %p244
        %p384 = pneg %p268
        %p385 = pneg %p265
        %s386 = smul.u32 8, %s28
        %p387 = scmp.lt.s32.totalorder %s386, 7
        %s388 = scalar_select %p387, %s386, 7
        %s389 = smul.addr %s388, 8
        %s390 = scalar_lea.vmem %s0, %s389
        %s391 = smul.u32 8, %s28
        %s392 = ssub.s32 1, %s27
        %s393 = smul.u32 %s28, %s392
        %p394 = scmp.lt.s32.totalorder %s393, 0
        %s395 = scalar_select %p394, %s393, 0
        %s396 = smul.addr %s395, 8
        %s397 = scalar_lea.vmem %s1, %s396
        %s398 = ssub.s32 1, %s27
        %s399 = smul.u32 %s28, %s398
        %s400 = smul.u32 %s28, %s27
        %s401 = smul.u32 8, %s400
        %p402 = scmp.lt.s32.totalorder %s401, 7
        %s403 = scalar_select %p402, %s401, 7
        %s404 = smul.addr %s403, 8
        %s405 = scalar_lea.vmem %s5, %s404
        %s406 = smul.u32 %s28, %s27
        %s407 = smul.u32 8, %s406
        %s408 = smul.u32 %s28, %s27
        %p409 = scmp.lt.s32.totalorder %s408, 0
        %s410 = scalar_select %p409, %s408, 0
        %s411 = scalar_lea.vmem %s6, %s410
        %s412 = smul.u32 %s28, %s27
        %p413 = scmp.eq.s32.totalorder %s27, 0
        // Predicated region
        $region53: #{tpu_custom_call.1} parent=51 // pred_check
          %p414 = pneg %p413
        $region54: #{tpu_custom_call.1} parent=51 // pred_check_branch
          %416 = sbr.rel (%p414) target = $region56
        $region55: #{tpu_custom_call.1} parent=51 // pred_region
          %p417 = scmp.eq.s32.totalorder %s28, 0
          // Predicated region
          $region57: #{tpu_custom_call.1} parent=55 // pred_check
            %p418 = pneg %p417
          $region58: #{tpu_custom_call.1} parent=55 // pred_check_branch
            %420 = sbr.rel (%p418) target = $region60
          $region59: #{tpu_custom_call.1} parent=55 // pred_region
            %vm421 = vcmask 73728
            %422 = vst.msk [vmem:[#allocation2] sm:$0x1] %vm421, 0.0
            %vm423 = vcmask 80896
            %424 = vst.msk [vmem:[#allocation3] sm:$0xff] %vm423, 0.0
            %vm425 = vcmask 74752
            %426 = vst.msk [vmem:[#allocation3 + $0x8] sm:$0x3] %vm425, 0.0
          $region60: #{tpu_custom_call.1} parent=55 // pred_fallthru
            _
          %v427 = vld [vmem:[%s390] sm:$0xff]
          %v428 = vld [vmem:[%s390 + $0x8] sm:$0xff]
          %v429 = vld [vmem:[%s390 + $0x10] sm:$0xff]
          %v430 = vld [vmem:[%s390 + $0x18] sm:$0xff]
          %v431 = vld [vmem:[%s390 + $0x20] sm:$0xff]
          %v432 = vld [vmem:[%s390 + $0x28] sm:$0xff]
          %v433 = vld [vmem:[%s390 + $0x30] sm:$0xff]
          %v434 = vld [vmem:[%s390 + $0x38] sm:$0xff]
          %v435 = vld [vmem:[#allocation2] sm:$0x1]
          %vm436 = vcmask 80896
          %v437 = vsel %vm436, %v427, 0.0
          %v438 = vsel %vm436, %v428, 0.0
          %v439 = vadd.f32 %v437, %v438
          %v440 = vsel %vm436, %v429, 0.0
          %v441 = vadd.f32 %v439, %v440
          %v442 = vsel %vm436, %v430, 0.0
          %v443 = vadd.f32 %v441, %v442
          %v444 = vsel %vm436, %v431, 0.0
          %v445 = vadd.f32 %v443, %v444
          %v446 = vsel %vm436, %v432, 0.0
          %v447 = vadd.f32 %v445, %v446
          %v448 = vsel %vm436, %v433, 0.0
          %v449 = vadd.f32 %v447, %v448
          %v450 = vsel %vm436, %v434, 0.0
          %v451 = vadd.f32 %v449, %v450
          %v452 = vrot.slane %v451, 4
          %v453 = vadd.f32 %v451, %v452
          %v454 = vrot.slane %v453, 2
          %v455 = vadd.f32 %v453, %v454
          %v456 = vrot.slane %v455, 1
          %v457 = vadd.f32 %v455, %v456
          %v458 = vadd.f32 %v435, %v457
          %vm459 = vcmask 73728
          %460 = vst.msk [vmem:[#allocation2] sm:$0x1] %vm459, %v458
          %v461 = vld [vmem:[#allocation3] sm:$0xff]
          %v462 = vld [vmem:[#allocation3 + $0x8] sm:$0x3]
          %v463 = vld [vmem:[%s397] sm:$0xff]
          %v464 = vld [vmem:[%s397 + $0x8] sm:$0x3]
          %vm465 = vcmask 523264
          %v467 = vsel %vm465, %v463, 0
          %v470 = vsel %vm465, %v464, 0
          %472 = vmatprep.subr.mxu0 0.0
          %473 = vmatpush1.msra.mxu0 0.0
          %474 = vmatprep.subr.mxu0 0.0
          %475 = vmatpush1.msra.mxu0 0.0
          %476 = vmatprep.subr.mxu0 0.0
          %477 = vmatpush1.msra.mxu0 0.0
          %478 = vmatprep.subr.mxu0 0.0
          %479 = vmatpush1.msra.mxu0 0.0
          %480 = vmatprep.subr.mxu0 0.0
          %481 = vmatpush1.msra.mxu0 0.0
          %482 = vmatprep.subr.mxu0 0.0
          %483 = vmatpush1.msra.mxu0 0.0
          %484 = vmatprep.subr.mxu0 0.0
          %485 = vmatpush1.msra.mxu0 0.0
          %486 = vmatprep.subr.mxu0 0.0
          %487 = vmatpush1.msra.mxu0 0.0
          %488 = vmatprep.subr.mxu0 0.0
          %489 = vmatpush1.msra.mxu0 %v434
          %490 = vmatprep.subr.mxu0 0.0
          %491 = vmatpush1.msra.mxu0 %v433
          %492 = vmatprep.subr.mxu0 0.0
          %493 = vmatpush1.msra.mxu0 %v432
          %494 = vmatprep.subr.mxu0 0.0
          %495 = vmatpush1.msra.mxu0 %v431
          %496 = vmatprep.subr.mxu0 0.0
          %497 = vmatpush1.msra.mxu0 %v430
          %498 = vmatprep.subr.mxu0 0.0
          %499 = vmatpush1.msra.mxu0 %v429
          %500 = vmatprep.subr.mxu0 0.0
          %501 = vmatpush1.msra.mxu0 %v428
          %502 = vmatprep.subr.mxu0 0.0
          %503 = vmatpush1.msra.mxu0 %v427
          %504 = vmatprep.subr.mxu0 0.0
          %505 = vmatpush2.msra.mxu0 0.0
          %506 = vmatprep.subr.mxu0 0.0
          %507 = vmatpush2.msra.mxu0 0.0
          %508 = vmatprep.subr.mxu0 0.0
          %509 = vmatpush2.msra.mxu0 0.0
          %510 = vmatprep.subr.mxu0 0.0
          %511 = vmatpush2.msra.mxu0 0.0
          %512 = vmatprep.subr.mxu0 0.0
          %513 = vmatpush2.msra.mxu0 0.0
          %514 = vmatprep.subr.mxu0 0.0
          %515 = vmatpush2.msra.mxu0 0.0
          %516 = vmatprep.subr.mxu0 0.0
          %517 = vmatpush2.msra.mxu0 0.0
          %518 = vmatprep.subr.mxu0 0.0
          %519 = vmatpush2.msra.mxu0 0.0
          %520 = vmatprep.subr.mxu0 0.0
          %521 = vmatpush2.msra.mxu0 0.0
          %522 = vmatprep.subr.mxu0 0.0
          %523 = vmatpush2.msra.mxu0 0.0
          %524 = vmatprep.subr.mxu0 0.0
          %525 = vmatpush2.msra.mxu0 0.0
          %526 = vmatprep.subr.mxu0 0.0
          %527 = vmatpush2.msra.mxu0 0.0
          %528 = vmatprep.subr.mxu0 0.0
          %529 = vmatpush2.msra.mxu0 0.0
          %530 = vmatprep.subr.mxu0 0.0
          %531 = vmatpush2.msra.mxu0 0.0
          %532 = vmatprep.subr.mxu0 0.0
          %533 = vmatpush2.msra.mxu0 0.0
          %534 = vmatprep.subr.mxu0 0.0
          %535 = vmatpush2.msra.mxu0 0.0
          %536 = vmatprep.mubr.f32.mxu0 0.0
          %537 = vmatmul.mubr.f32.gmra.mxu0 %v467
          %v538 = vpop.f32.mrf.mxu0
          %v539 = vadd.f32 0.0, %v538
          %v540 = vpop.f32.mrf.mxu0
          %541 = vmatprep.mubr.f32.mxu0 0.0
          %542 = vmatmul.mubr.f32.gmra.mxu0 %v470
          %v543 = vpop.f32.mrf.mxu0
          %v544 = vadd.f32 0.0, %v543
          %v545 = vpop.f32.mrf.mxu0
          %546 = vdwg.mxu0
          %v547 = vadd.f32 %v461, %v539
          %v548 = vadd.f32 %v462, %v544
          %549 = vst.msk [vmem:[#allocation3] sm:$0xff] %vm436, %v547
          %vm550 = vcmask 74752
          %551 = vst.msk [vmem:[#allocation3 + $0x8] sm:$0x3] %vm550, %v548
          // Predicated region
          $region61: #{tpu_custom_call.1} parent=55 // pred_check
            %p552 = pneg %p417
          $region62: #{tpu_custom_call.1} parent=55 // pred_check_branch
            %554 = sbr.rel (%p552) target = $region64
          $region63: #{tpu_custom_call.1} parent=55 // pred_region
            %v555 = vld [vmem:[%s2] sm:$0xff]
            %v556 = vld [vmem:[%s2 + $0x8] sm:$0x3]
            %v557 = vld [vmem:[#allocation2] sm:$0x1]
            %v559 = vsel %vm436, %v557, 0
            %vm561 = vcmask 1041408
            %v563 = vsel %vm561, %v556, 0
            %565 = vmatprep.subr.mxu0 0.0
            %566 = vmatpush1.msra.mxu0 0.0
            %567 = vmatprep.subr.mxu0 0.0
            %568 = vmatpush1.msra.mxu0 0.0
            %569 = vmatprep.subr.mxu0 0.0
            %570 = vmatpush1.msra.mxu0 0.0
            %571 = vmatprep.subr.mxu0 0.0
            %572 = vmatpush1.msra.mxu0 0.0
            %573 = vmatprep.subr.mxu0 0.0
            %574 = vmatpush1.msra.mxu0 0.0
            %575 = vmatprep.subr.mxu0 0.0
            %576 = vmatpush1.msra.mxu0 0.0
            %577 = vmatprep.subr.mxu0 0.0
            %578 = vmatpush1.msra.mxu0 0.0
            %579 = vmatprep.subr.mxu0 0.0
            %580 = vmatpush1.msra.mxu0 0.0
            %581 = vmatprep.subr.mxu0 0.0
            %582 = vmatpush1.msra.mxu0 0.0
            %583 = vmatprep.subr.mxu0 0.0
            %584 = vmatpush1.msra.mxu0 0.0
            %585 = vmatprep.subr.mxu0 0.0
            %586 = vmatpush1.msra.mxu0 0.0
            %587 = vmatprep.subr.mxu0 0.0
            %588 = vmatpush1.msra.mxu0 0.0
            %589 = vmatprep.subr.mxu0 0.0
            %590 = vmatpush1.msra.mxu0 0.0
            %591 = vmatprep.subr.mxu0 0.0
            %592 = vmatpush1.msra.mxu0 0.0
            %593 = vmatprep.subr.mxu0 0.0
            %594 = vmatpush1.msra.mxu0 %v563
            %595 = vmatprep.subr.mxu0 0.0
            %596 = vmatpush1.msra.mxu0 %v555
            %597 = vmatprep.subr.mxu0 0.0
            %598 = vmatpush2.msra.mxu0 0.0
            %599 = vmatprep.subr.mxu0 0.0
            %600 = vmatpush2.msra.mxu0 0.0
            %601 = vmatprep.subr.mxu0 0.0
            %602 = vmatpush2.msra.mxu0 0.0
            %603 = vmatprep.subr.mxu0 0.0
            %604 = vmatpush2.msra.mxu0 0.0
            %605 = vmatprep.subr.mxu0 0.0
            %606 = vmatpush2.msra.mxu0 0.0
            %607 = vmatprep.subr.mxu0 0.0
            %608 = vmatpush2.msra.mxu0 0.0
            %609 = vmatprep.subr.mxu0 0.0
            %610 = vmatpush2.msra.mxu0 0.0
            %611 = vmatprep.subr.mxu0 0.0
            %612 = vmatpush2.msra.mxu0 0.0
            %613 = vmatprep.subr.mxu0 0.0
            %614 = vmatpush2.msra.mxu0 0.0
            %615 = vmatprep.subr.mxu0 0.0
            %616 = vmatpush2.msra.mxu0 0.0
            %617 = vmatprep.subr.mxu0 0.0
            %618 = vmatpush2.msra.mxu0 0.0
            %619 = vmatprep.subr.mxu0 0.0
            %620 = vmatpush2.msra.mxu0 0.0
            %621 = vmatprep.subr.mxu0 0.0
            %622 = vmatpush2.msra.mxu0 0.0
            %623 = vmatprep.subr.mxu0 0.0
            %624 = vmatpush2.msra.mxu0 0.0
            %625 = vmatprep.subr.mxu0 0.0
            %626 = vmatpush2.msra.mxu0 0.0
            %627 = vmatprep.subr.mxu0 0.0
            %628 = vmatpush2.msra.mxu0 0.0
            %629 = vmatprep.mubr.f32.mxu0 0.0
            %630 = vmatmul.mubr.f32.gmra.mxu0 %v559
            %v631 = vpop.f32.mrf.mxu0
            %v632 = vadd.f32 0.0, %v631
            %v633 = vpop.f32.mrf.mxu0
            %634 = vdwg.mxu0
            %v635 = vmul.f32 %v632, 0.015625
            %v636 = vld [vmem:[#allocation3] sm:$0xff]
            %v637 = vld [vmem:[#allocation3 + $0x8] sm:$0x3]
            %v639 = vsel %vm436, %v636, 0
            %v642 = vsel %vm436, %v637, 0
            %644 = vmatprep.subr.mxu0 0.0
            %645 = vmatpush1.msra.mxu0 0.0
            %646 = vmatprep.subr.mxu0 0.0
            %647 = vmatpush1.msra.mxu0 0.0
            %648 = vmatprep.subr.mxu0 0.0
            %649 = vmatpush1.msra.mxu0 0.0
            %650 = vmatprep.subr.mxu0 0.0
            %651 = vmatpush1.msra.mxu0 0.0
            %652 = vmatprep.subr.mxu0 0.0
            %653 = vmatpush1.msra.mxu0 0.0
            %654 = vmatprep.subr.mxu0 0.0
            %655 = vmatpush1.msra.mxu0 0.0
            %656 = vmatprep.subr.mxu0 0.0
            %657 = vmatpush1.msra.mxu0 0.0
            %658 = vmatprep.subr.mxu0 0.0
            %659 = vmatpush1.msra.mxu0 0.0
            %660 = vmatprep.subr.mxu0 0.0
            %661 = vmatpush1.msra.mxu0 0.0
            %662 = vmatprep.subr.mxu0 0.0
            %663 = vmatpush1.msra.mxu0 0.0
            %664 = vmatprep.subr.mxu0 0.0
            %665 = vmatpush1.msra.mxu0 0.0
            %666 = vmatprep.subr.mxu0 0.0
            %667 = vmatpush1.msra.mxu0 0.0
            %668 = vmatprep.subr.mxu0 0.0
            %669 = vmatpush1.msra.mxu0 0.0
            %670 = vmatprep.subr.mxu0 0.0
            %671 = vmatpush1.msra.mxu0 0.0
            %672 = vmatprep.subr.mxu0 0.0
            %673 = vmatpush1.msra.mxu0 %v563
            %674 = vmatprep.subr.mxu0 0.0
            %675 = vmatpush1.msra.mxu0 %v555
            %676 = vmatprep.subr.mxu0 0.0
            %677 = vmatpush2.msra.mxu0 0.0
            %678 = vmatprep.subr.mxu0 0.0
            %679 = vmatpush2.msra.mxu0 0.0
            %680 = vmatprep.subr.mxu0 0.0
            %681 = vmatpush2.msra.mxu0 0.0
            %682 = vmatprep.subr.mxu0 0.0
            %683 = vmatpush2.msra.mxu0 0.0
            %684 = vmatprep.subr.mxu0 0.0
            %685 = vmatpush2.msra.mxu0 0.0
            %686 = vmatprep.subr.mxu0 0.0
            %687 = vmatpush2.msra.mxu0 0.0
            %688 = vmatprep.subr.mxu0 0.0
            %689 = vmatpush2.msra.mxu0 0.0
            %690 = vmatprep.subr.mxu0 0.0
            %691 = vmatpush2.msra.mxu0 0.0
            %692 = vmatprep.subr.mxu0 0.0
            %693 = vmatpush2.msra.mxu0 0.0
            %694 = vmatprep.subr.mxu0 0.0
            %695 = vmatpush2.msra.mxu0 0.0
            %696 = vmatprep.subr.mxu0 0.0
            %697 = vmatpush2.msra.mxu0 0.0
            %698 = vmatprep.subr.mxu0 0.0
            %699 = vmatpush2.msra.mxu0 0.0
            %700 = vmatprep.subr.mxu0 0.0
            %701 = vmatpush2.msra.mxu0 0.0
            %702 = vmatprep.subr.mxu0 0.0
            %703 = vmatpush2.msra.mxu0 0.0
            %704 = vmatprep.subr.mxu0 0.0
            %705 = vmatpush2.msra.mxu0 0.0
            %706 = vmatprep.subr.mxu0 0.0
            %707 = vmatpush2.msra.mxu0 0.0
            %708 = vmatprep.mubr.f32.mxu0 0.0
            %709 = vmatmul.mubr.f32.gmra.mxu0 %v639
            %v710 = vpop.f32.mrf.mxu0
            %v711 = vadd.f32 0.0, %v710
            %v712 = vpop.f32.mrf.mxu0
            %713 = vmatprep.mubr.f32.mxu0 0.0
            %714 = vmatmul.mubr.f32.gmra.mxu0 %v642
            %v715 = vpop.f32.mrf.mxu0
            %v716 = vadd.f32 0.0, %v715
            %v717 = vpop.f32.mrf.mxu0
            %718 = vdwg.mxu0
            %v719 = vmul.f32 %v555, %v711
            %v720 = vmul.f32 %v556, %v716
            %vm721 = vcmask 261120
            %v722 = vsel %vm721, %v719, 0.0
            %vm723 = vcmask 254976
            %v724 = vsel %vm723, %v720, 0.0
            %v725 = vadd.f32 %v722, %v724
            %v726 = vrot.slane %v725, 4
            %v727 = vadd.f32 %v725, %v726
            %v728 = vrot.slane %v727, 2
            %v729 = vadd.f32 %v727, %v728
            %v730 = vrot.slane %v729, 1
            %v731 = vadd.f32 %v729, %v730
            %v732 = vmul.f32 %v731, 0.015625
            %v733 = vmul.f32 %v635, %v635
            %v734 = vsub.f32 %v732, %v733
            %v735 = vld [vmem:[%s3] sm:$0x1]
            %v736 = vadd.f32 %v734, 0.001
            %v737 = vrsqrt.pop %v736
            %v738 = vmul.f32 %v735, %v737
            %vm739 = vcmask 253952
            %740 = vst.msk [vmem:[#allocation8] sm:$0x1] %vm739, %v738
            %v741 = vld [vmem:[%s4] sm:$0x1]
            %v742 = vmul.f32 %v635, %v738
            %v743 = vsub.f32 %v741, %v742
            %744 = vst.msk [vmem:[#allocation8 + $0x1] sm:$0x1] %vm739, %v743
          $region64: #{tpu_custom_call.1} parent=55 // pred_fallthru
            _
        $region56: #{tpu_custom_call.1} parent=51 // pred_fallthru
          _
        %p745 = scmp.eq.s32.totalorder %s27, 1
        // Predicated region
        $region65: #{tpu_custom_call.1} parent=51 // pred_check
          %p746 = pneg %p745
        $region66: #{tpu_custom_call.1} parent=51 // pred_check_branch
          %748 = sbr.rel (%p746) target = $region68
        $region67: #{tpu_custom_call.1} parent=51 // pred_region
          %p749 = scmp.eq.s32.totalorder %s28, 0
          // Predicated region
          $region69: #{tpu_custom_call.1} parent=67 // pred_check
            %p750 = pneg %p749
          $region70: #{tpu_custom_call.1} parent=67 // pred_check_branch
            %752 = sbr.rel (%p750) target = $region72
          $region71: #{tpu_custom_call.1} parent=67 // pred_region
            %vm753 = vcmask 261120
            %754 = vst.msk [vmem:[#allocation4] sm:$0xff] %vm753, 0.0
            %755 = vst.msk [vmem:[#allocation5] sm:$0xff] %vm753, 0.0
          $region72: #{tpu_custom_call.1} parent=67 // pred_fallthru
            _
          %v756 = vld [vmem:[%s390] sm:$0xff]
          %v757 = vld [vmem:[%s390 + $0x8] sm:$0xff]
          %v758 = vld [vmem:[%s390 + $0x10] sm:$0xff]
          %v759 = vld [vmem:[%s390 + $0x18] sm:$0xff]
          %v760 = vld [vmem:[%s390 + $0x20] sm:$0xff]
          %v761 = vld [vmem:[%s390 + $0x28] sm:$0xff]
          %v762 = vld [vmem:[%s390 + $0x30] sm:$0xff]
          %v763 = vld [vmem:[%s390 + $0x38] sm:$0xff]
          %v764 = vld [vmem:[%s2] sm:$0xff]
          %v765 = vld [vmem:[%s2 + $0x8] sm:$0x3]
          %vm766 = vcmask 80896
          %v768 = vsel %vm766, %v756, 0
          %v771 = vsel %vm766, %v757, 0
          %v774 = vsel %vm766, %v758, 0
          %v777 = vsel %vm766, %v759, 0
          %v780 = vsel %vm766, %v760, 0
          %v783 = vsel %vm766, %v761, 0
          %v786 = vsel %vm766, %v762, 0
          %v789 = vsel %vm766, %v763, 0
          %vm791 = vcmask 1041408
          %v793 = vsel %vm791, %v765, 0
          %795 = vmatprep.subr.mxu0 0.0
          %796 = vmatpush1.msra.mxu0 0.0
          %797 = vmatprep.subr.mxu0 0.0
          %798 = vmatpush1.msra.mxu0 0.0
          %799 = vmatprep.subr.mxu0 0.0
          %800 = vmatpush1.msra.mxu0 0.0
          %801 = vmatprep.subr.mxu0 0.0
          %802 = vmatpush1.msra.mxu0 0.0
          %803 = vmatprep.subr.mxu0 0.0
          %804 = vmatpush1.msra.mxu0 0.0
          %805 = vmatprep.subr.mxu0 0.0
          %806 = vmatpush1.msra.mxu0 0.0
          %807 = vmatprep.subr.mxu0 0.0
          %808 = vmatpush1.msra.mxu0 0.0
          %809 = vmatprep.subr.mxu0 0.0
          %810 = vmatpush1.msra.mxu0 0.0
          %811 = vmatprep.subr.mxu0 0.0
          %812 = vmatpush1.msra.mxu0 0.0
          %813 = vmatprep.subr.mxu0 0.0
          %814 = vmatpush1.msra.mxu0 0.0
          %815 = vmatprep.subr.mxu0 0.0
          %816 = vmatpush1.msra.mxu0 0.0
          %817 = vmatprep.subr.mxu0 0.0
          %818 = vmatpush1.msra.mxu0 0.0
          %819 = vmatprep.subr.mxu0 0.0
          %820 = vmatpush1.msra.mxu0 0.0
          %821 = vmatprep.subr.mxu0 0.0
          %822 = vmatpush1.msra.mxu0 0.0
          %823 = vmatprep.subr.mxu0 0.0
          %824 = vmatpush1.msra.mxu0 %v793
          %825 = vmatprep.subr.mxu0 0.0
          %826 = vmatpush1.msra.mxu0 %v764
          %827 = vmatprep.subr.mxu0 0.0
          %828 = vmatpush2.msra.mxu0 0.0
          %829 = vmatprep.subr.mxu0 0.0
          %830 = vmatpush2.msra.mxu0 0.0
          %831 = vmatprep.subr.mxu0 0.0
          %832 = vmatpush2.msra.mxu0 0.0
          %833 = vmatprep.subr.mxu0 0.0
          %834 = vmatpush2.msra.mxu0 0.0
          %835 = vmatprep.subr.mxu0 0.0
          %836 = vmatpush2.msra.mxu0 0.0
          %837 = vmatprep.subr.mxu0 0.0
          %838 = vmatpush2.msra.mxu0 0.0
          %839 = vmatprep.subr.mxu0 0.0
          %840 = vmatpush2.msra.mxu0 0.0
          %841 = vmatprep.subr.mxu0 0.0
          %842 = vmatpush2.msra.mxu0 0.0
          %843 = vmatprep.subr.mxu0 0.0
          %844 = vmatpush2.msra.mxu0 0.0
          %845 = vmatprep.subr.mxu0 0.0
          %846 = vmatpush2.msra.mxu0 0.0
          %847 = vmatprep.subr.mxu0 0.0
          %848 = vmatpush2.msra.mxu0 0.0
          %849 = vmatprep.subr.mxu0 0.0
          %850 = vmatpush2.msra.mxu0 0.0
          %851 = vmatprep.subr.mxu0 0.0
          %852 = vmatpush2.msra.mxu0 0.0
          %853 = vmatprep.subr.mxu0 0.0
          %854 = vmatpush2.msra.mxu0 0.0
          %855 = vmatprep.subr.mxu0 0.0
          %856 = vmatpush2.msra.mxu0 0.0
          %857 = vmatprep.subr.mxu0 0.0
          %858 = vmatpush2.msra.mxu0 0.0
          %859 = vmatprep.mubr.f32.mxu0 0.0
          %860 = vmatmul.mubr.f32.gmra.mxu0 %v768
          %v861 = vpop.f32.mrf.mxu0
          %v862 = vadd.f32 0.0, %v861
          %v863 = vpop.f32.mrf.mxu0
          %864 = vmatprep.mubr.f32.mxu0 0.0
          %865 = vmatmul.mubr.f32.gmra.mxu0 %v771
          %v866 = vpop.f32.mrf.mxu0
          %v867 = vadd.f32 0.0, %v866
          %v868 = vpop.f32.mrf.mxu0
          %869 = vmatprep.mubr.f32.mxu0 0.0
          %870 = vmatmul.mubr.f32.gmra.mxu0 %v774
          %v871 = vpop.f32.mrf.mxu0
          %v872 = vadd.f32 0.0, %v871
          %v873 = vpop.f32.mrf.mxu0
          %874 = vmatprep.mubr.f32.mxu0 0.0
          %875 = vmatmul.mubr.f32.gmra.mxu0 %v777
          %v876 = vpop.f32.mrf.mxu0
          %v877 = vadd.f32 0.0, %v876
          %v878 = vpop.f32.mrf.mxu0
          %879 = vmatprep.mubr.f32.mxu0 0.0
          %880 = vmatmul.mubr.f32.gmra.mxu0 %v780
          %v881 = vpop.f32.mrf.mxu0
          %v882 = vadd.f32 0.0, %v881
          %v883 = vpop.f32.mrf.mxu0
          %884 = vmatprep.mubr.f32.mxu0 0.0
          %885 = vmatmul.mubr.f32.gmra.mxu0 %v783
          %v886 = vpop.f32.mrf.mxu0
          %v887 = vadd.f32 0.0, %v886
          %v888 = vpop.f32.mrf.mxu0
          %889 = vmatprep.mubr.f32.mxu0 0.0
          %890 = vmatmul.mubr.f32.gmra.mxu0 %v786
          %v891 = vpop.f32.mrf.mxu0
          %v892 = vadd.f32 0.0, %v891
          %v893 = vpop.f32.mrf.mxu0
          %894 = vmatprep.mubr.f32.mxu0 0.0
          %895 = vmatmul.mubr.f32.gmra.mxu0 %v789
          %v896 = vpop.f32.mrf.mxu0
          %v897 = vadd.f32 0.0, %v896
          %v898 = vpop.f32.mrf.mxu0
          %899 = vdwg.mxu0
          %v900 = vld [vmem:[#allocation8] sm:$0x1]
          %v901 = vlaneseq
          %v902 = vshrl.u32 %v901, 7
          %v903 = vsub.s32 0, %v902
          %v904 = vrot.slane %v900, %v903
          %v905 = vmul.f32 %v862, %v904
          %v906 = vmul.f32 %v867, %v904
          %v907 = vmul.f32 %v872, %v904
          %v908 = vmul.f32 %v877, %v904
          %v909 = vmul.f32 %v882, %v904
          %v910 = vmul.f32 %v887, %v904
          %v911 = vmul.f32 %v892, %v904
          %v912 = vmul.f32 %v897, %v904
          %v913 = vld [vmem:[#allocation8 + $0x1] sm:$0x1]
          %v914 = vlaneseq
          %v915 = vshrl.u32 %v914, 7
          %v916 = vsub.s32 0, %v915
          %v917 = vrot.slane %v913, %v916
          %v918 = vadd.f32 %v905, %v917
          %v919 = vadd.f32 %v906, %v917
          %v920 = vadd.f32 %v907, %v917
          %v921 = vadd.f32 %v908, %v917
          %v922 = vadd.f32 %v909, %v917
          %v923 = vadd.f32 %v910, %v917
          %v924 = vadd.f32 %v911, %v917
          %v925 = vadd.f32 %v912, %v917
          %v926 = vmax.f32 %v918, 0.0
          %v927 = vmax.f32 %v919, 0.0
          %v928 = vmax.f32 %v920, 0.0
          %v929 = vmax.f32 %v921, 0.0
          %v930 = vmax.f32 %v922, 0.0
          %v931 = vmax.f32 %v923, 0.0
          %v932 = vmax.f32 %v924, 0.0
          %v933 = vmax.f32 %v925, 0.0
          %v934 = vld [vmem:[%s411] sm:$0x1]
          %v935 = vlaneseq
          %v936 = vshrl.u32 %v935, 7
          %v937 = vlaneseq
          %v938 = vshrl.u32 %v937, 7
          %v939 = vsub.s32 0, %v938
          %v940 = vrot.slane %v934, %v939
          %vm941 = vcmp.eq.s32.totalorder %v936, %v940
          %v942 = vsel %vm941, 1, 0
          %v943 = vcvt.s32.f32 %v942
          %v944 = vld [vmem:[#allocation4] sm:$0xff]
          %vm945 = vcmask 523264
          %v947 = vsel %vm945, %v943, 0
          %949 = vmatprep.subr.mxu0 0.0
          %950 = vmatpush1.msra.mxu0 0.0
          %951 = vmatprep.subr.mxu0 0.0
          %952 = vmatpush1.msra.mxu0 0.0
          %953 = vmatprep.subr.mxu0 0.0
          %954 = vmatpush1.msra.mxu0 0.0
          %955 = vmatprep.subr.mxu0 0.0
          %956 = vmatpush1.msra.mxu0 0.0
          %957 = vmatprep.subr.mxu0 0.0
          %958 = vmatpush1.msra.mxu0 0.0
          %959 = vmatprep.subr.mxu0 0.0
          %960 = vmatpush1.msra.mxu0 0.0
          %961 = vmatprep.subr.mxu0 0.0
          %962 = vmatpush1.msra.mxu0 0.0
          %963 = vmatprep.subr.mxu0 0.0
          %964 = vmatpush1.msra.mxu0 0.0
          %965 = vmatprep.subr.mxu0 0.0
          %966 = vmatpush1.msra.mxu0 %v933
          %967 = vmatprep.subr.mxu0 0.0
          %968 = vmatpush1.msra.mxu0 %v932
          %969 = vmatprep.subr.mxu0 0.0
          %970 = vmatpush1.msra.mxu0 %v931
          %971 = vmatprep.subr.mxu0 0.0
          %972 = vmatpush1.msra.mxu0 %v930
          %973 = vmatprep.subr.mxu0 0.0
          %974 = vmatpush1.msra.mxu0 %v929
          %975 = vmatprep.subr.mxu0 0.0
          %976 = vmatpush1.msra.mxu0 %v928
          %977 = vmatprep.subr.mxu0 0.0
          %978 = vmatpush1.msra.mxu0 %v927
          %979 = vmatprep.subr.mxu0 0.0
          %980 = vmatpush1.msra.mxu0 %v926
          %981 = vmatprep.subr.mxu0 0.0
          %982 = vmatpush2.msra.mxu0 0.0
          %983 = vmatprep.subr.mxu0 0.0
          %984 = vmatpush2.msra.mxu0 0.0
          %985 = vmatprep.subr.mxu0 0.0
          %986 = vmatpush2.msra.mxu0 0.0
          %987 = vmatprep.subr.mxu0 0.0
          %988 = vmatpush2.msra.mxu0 0.0
          %989 = vmatprep.subr.mxu0 0.0
          %990 = vmatpush2.msra.mxu0 0.0
          %991 = vmatprep.subr.mxu0 0.0
          %992 = vmatpush2.msra.mxu0 0.0
          %993 = vmatprep.subr.mxu0 0.0
          %994 = vmatpush2.msra.mxu0 0.0
          %995 = vmatprep.subr.mxu0 0.0
          %996 = vmatpush2.msra.mxu0 0.0
          %997 = vmatprep.subr.mxu0 0.0
          %998 = vmatpush2.msra.mxu0 0.0
          %999 = vmatprep.subr.mxu0 0.0
          %1000 = vmatpush2.msra.mxu0 0.0
          %1001 = vmatprep.subr.mxu0 0.0
          %1002 = vmatpush2.msra.mxu0 0.0
          %1003 = vmatprep.subr.mxu0 0.0
          %1004 = vmatpush2.msra.mxu0 0.0
          %1005 = vmatprep.subr.mxu0 0.0
          %1006 = vmatpush2.msra.mxu0 0.0
          %1007 = vmatprep.subr.mxu0 0.0
          %1008 = vmatpush2.msra.mxu0 0.0
          %1009 = vmatprep.subr.mxu0 0.0
          %1010 = vmatpush2.msra.mxu0 0.0
          %1011 = vmatprep.subr.mxu0 0.0
          %1012 = vmatpush2.msra.mxu0 0.0
          %1013 = vmatprep.mubr.f32.mxu0 0.0
          %1014 = vmatmul.mubr.f32.gmra.mxu0 %v947
          %v1015 = vpop.f32.mrf.mxu0
          %v1016 = vadd.f32 0.0, %v1015
          %v1017 = vpop.f32.mrf.mxu0
          %1018 = vdwg.mxu0
          %v1019 = vadd.f32 %v944, %v1016
          %vm1020 = vcmask 261120
          %1021 = vst.msk [vmem:[#allocation4] sm:$0xff] %vm1020, %v1019
          %v1022 = vld [vmem:[%s405] sm:$0xff]
          %v1023 = vld [vmem:[%s405 + $0x8] sm:$0xff]
          %v1024 = vld [vmem:[%s405 + $0x10] sm:$0xff]
          %v1025 = vld [vmem:[%s405 + $0x18] sm:$0xff]
          %v1026 = vld [vmem:[%s405 + $0x20] sm:$0xff]
          %v1027 = vld [vmem:[%s405 + $0x28] sm:$0xff]
          %v1028 = vld [vmem:[%s405 + $0x30] sm:$0xff]
          %v1029 = vld [vmem:[%s405 + $0x38] sm:$0xff]
          %v1030 = vstv 0
          %v1031 = vadd.s32 %v1030, 1
          %v1032 = vadd.s32 %v1030, 2
          %v1033 = vadd.s32 %v1030, 3
          %v1034 = vadd.s32 %v1030, 4
          %v1035 = vadd.s32 %v1030, 5
          %v1036 = vadd.s32 %v1030, 6
          %v1037 = vadd.s32 %v1030, 7
          %vm1038 = vcmp.eq.s32.totalorder %v1030, %v1022
          %vm1039 = vcmp.eq.s32.totalorder %v1030, %v1023
          %vm1040 = vcmp.eq.s32.totalorder %v1030, %v1024
          %vm1041 = vcmp.eq.s32.totalorder %v1030, %v1025
          %vm1042 = vcmp.eq.s32.totalorder %v1030, %v1026
          %vm1043 = vcmp.eq.s32.totalorder %v1030, %v1027
          %vm1044 = vcmp.eq.s32.totalorder %v1030, %v1028
          %vm1045 = vcmp.eq.s32.totalorder %v1030, %v1029
          %vm1046 = vcmp.eq.s32.totalorder %v1031, %v1022
          %vm1047 = vcmp.eq.s32.totalorder %v1031, %v1023
          %vm1048 = vcmp.eq.s32.totalorder %v1031, %v1024
          %vm1049 = vcmp.eq.s32.totalorder %v1031, %v1025
          %vm1050 = vcmp.eq.s32.totalorder %v1031, %v1026
          %vm1051 = vcmp.eq.s32.totalorder %v1031, %v1027
          %vm1052 = vcmp.eq.s32.totalorder %v1031, %v1028
          %vm1053 = vcmp.eq.s32.totalorder %v1031, %v1029
          %vm1054 = vcmp.eq.s32.totalorder %v1032, %v1022
          %vm1055 = vcmp.eq.s32.totalorder %v1032, %v1023
          %vm1056 = vcmp.eq.s32.totalorder %v1032, %v1024
          %vm1057 = vcmp.eq.s32.totalorder %v1032, %v1025
          %vm1058 = vcmp.eq.s32.totalorder %v1032, %v1026
          %vm1059 = vcmp.eq.s32.totalorder %v1032, %v1027
          %vm1060 = vcmp.eq.s32.totalorder %v1032, %v1028
          %vm1061 = vcmp.eq.s32.totalorder %v1032, %v1029
          %vm1062 = vcmp.eq.s32.totalorder %v1033, %v1022
          %vm1063 = vcmp.eq.s32.totalorder %v1033, %v1023
          %vm1064 = vcmp.eq.s32.totalorder %v1033, %v1024
          %vm1065 = vcmp.eq.s32.totalorder %v1033, %v1025
          %vm1066 = vcmp.eq.s32.totalorder %v1033, %v1026
          %vm1067 = vcmp.eq.s32.totalorder %v1033, %v1027
          %vm1068 = vcmp.eq.s32.totalorder %v1033, %v1028
          %vm1069 = vcmp.eq.s32.totalorder %v1033, %v1029
          %vm1070 = vcmp.eq.s32.totalorder %v1034, %v1022
          %vm1071 = vcmp.eq.s32.totalorder %v1034, %v1023
          %vm1072 = vcmp.eq.s32.totalorder %v1034, %v1024
          %vm1073 = vcmp.eq.s32.totalorder %v1034, %v1025
          %vm1074 = vcmp.eq.s32.totalorder %v1034, %v1026
          %vm1075 = vcmp.eq.s32.totalorder %v1034, %v1027
          %vm1076 = vcmp.eq.s32.totalorder %v1034, %v1028
          %vm1077 = vcmp.eq.s32.totalorder %v1034, %v1029
          %vm1078 = vcmp.eq.s32.totalorder %v1035, %v1022
          %vm1079 = vcmp.eq.s32.totalorder %v1035, %v1023
          %vm1080 = vcmp.eq.s32.totalorder %v1035, %v1024
          %vm1081 = vcmp.eq.s32.totalorder %v1035, %v1025
          %vm1082 = vcmp.eq.s32.totalorder %v1035, %v1026
          %vm1083 = vcmp.eq.s32.totalorder %v1035, %v1027
          %vm1084 = vcmp.eq.s32.totalorder %v1035, %v1028
          %vm1085 = vcmp.eq.s32.totalorder %v1035, %v1029
          %vm1086 = vcmp.eq.s32.totalorder %v1036, %v1022
          %vm1087 = vcmp.eq.s32.totalorder %v1036, %v1023
          %vm1088 = vcmp.eq.s32.totalorder %v1036, %v1024
          %vm1089 = vcmp.eq.s32.totalorder %v1036, %v1025
          %vm1090 = vcmp.eq.s32.totalorder %v1036, %v1026
          %vm1091 = vcmp.eq.s32.totalorder %v1036, %v1027
          %vm1092 = vcmp.eq.s32.totalorder %v1036, %v1028
          %vm1093 = vcmp.eq.s32.totalorder %v1036, %v1029
          %vm1094 = vcmp.eq.s32.totalorder %v1037, %v1022
          %vm1095 = vcmp.eq.s32.totalorder %v1037, %v1023
          %vm1096 = vcmp.eq.s32.totalorder %v1037, %v1024
          %vm1097 = vcmp.eq.s32.totalorder %v1037, %v1025
          %vm1098 = vcmp.eq.s32.totalorder %v1037, %v1026
          %vm1099 = vcmp.eq.s32.totalorder %v1037, %v1027
          %vm1100 = vcmp.eq.s32.totalorder %v1037, %v1028
          %vm1101 = vcmp.eq.s32.totalorder %v1037, %v1029
          %v1102 = vsel %vm1038, 1, 0
          %v1103 = vsel %vm1039, 1, 0
          %v1104 = vsel %vm1040, 1, 0
          %v1105 = vsel %vm1041, 1, 0
          %v1106 = vsel %vm1042, 1, 0
          %v1107 = vsel %vm1043, 1, 0
          %v1108 = vsel %vm1044, 1, 0
          %v1109 = vsel %vm1045, 1, 0
          %v1110 = vsel %vm1046, 1, 0
          %v1111 = vsel %vm1047, 1, 0
          %v1112 = vsel %vm1048, 1, 0
          %v1113 = vsel %vm1049, 1, 0
          %v1114 = vsel %vm1050, 1, 0
          %v1115 = vsel %vm1051, 1, 0
          %v1116 = vsel %vm1052, 1, 0
          %v1117 = vsel %vm1053, 1, 0
          %v1118 = vsel %vm1054, 1, 0
          %v1119 = vsel %vm1055, 1, 0
          %v1120 = vsel %vm1056, 1, 0
          %v1121 = vsel %vm1057, 1, 0
          %v1122 = vsel %vm1058, 1, 0
          %v1123 = vsel %vm1059, 1, 0
          %v1124 = vsel %vm1060, 1, 0
          %v1125 = vsel %vm1061, 1, 0
          %v1126 = vsel %vm1062, 1, 0
          %v1127 = vsel %vm1063, 1, 0
          %v1128 = vsel %vm1064, 1, 0
          %v1129 = vsel %vm1065, 1, 0
          %v1130 = vsel %vm1066, 1, 0
          %v1131 = vsel %vm1067, 1, 0
          %v1132 = vsel %vm1068, 1, 0
          %v1133 = vsel %vm1069, 1, 0
          %v1134 = vsel %vm1070, 1, 0
          %v1135 = vsel %vm1071, 1, 0
          %v1136 = vsel %vm1072, 1, 0
          %v1137 = vsel %vm1073, 1, 0
          %v1138 = vsel %vm1074, 1, 0
          %v1139 = vsel %vm1075, 1, 0
          %v1140 = vsel %vm1076, 1, 0
          %v1141 = vsel %vm1077, 1, 0
          %v1142 = vsel %vm1078, 1, 0
          %v1143 = vsel %vm1079, 1, 0
          %v1144 = vsel %vm1080, 1, 0
          %v1145 = vsel %vm1081, 1, 0
          %v1146 = vsel %vm1082, 1, 0
          %v1147 = vsel %vm1083, 1, 0
          %v1148 = vsel %vm1084, 1, 0
          %v1149 = vsel %vm1085, 1, 0
          %v1150 = vsel %vm1086, 1, 0
          %v1151 = vsel %vm1087, 1, 0
          %v1152 = vsel %vm1088, 1, 0
          %v1153 = vsel %vm1089, 1, 0
          %v1154 = vsel %vm1090, 1, 0
          %v1155 = vsel %vm1091, 1, 0
          %v1156 = vsel %vm1092, 1, 0
          %v1157 = vsel %vm1093, 1, 0
          %v1158 = vsel %vm1094, 1, 0
          %v1159 = vsel %vm1095, 1, 0
          %v1160 = vsel %vm1096, 1, 0
          %v1161 = vsel %vm1097, 1, 0
          %v1162 = vsel %vm1098, 1, 0
          %v1163 = vsel %vm1099, 1, 0
          %v1164 = vsel %vm1100, 1, 0
          %v1165 = vsel %vm1101, 1, 0
          %1166 = vset.pattern.permute.xlu0 0
          %1167 = vperm.xlu0 %1166, %v1102
          %v1168 = vpop.permute.xlu0 %1167
          %1169 = vset.pattern.permute.xlu0 0
          %1170 = vperm.xlu0 %1169, %v1103
          %v1171 = vpop.permute.xlu0 %1170
          %1172 = vset.pattern.permute.xlu0 0
          %1173 = vperm.xlu0 %1172, %v1104
          %v1174 = vpop.permute.xlu0 %1173
          %1175 = vset.pattern.permute.xlu0 0
          %1176 = vperm.xlu0 %1175, %v1105
          %v1177 = vpop.permute.xlu0 %1176
          %1178 = vset.pattern.permute.xlu0 0
          %1179 = vperm.xlu0 %1178, %v1106
          %v1180 = vpop.permute.xlu0 %1179
          %1181 = vset.pattern.permute.xlu0 0
          %1182 = vperm.xlu0 %1181, %v1107
          %v1183 = vpop.permute.xlu0 %1182
          %1184 = vset.pattern.permute.xlu0 0
          %1185 = vperm.xlu0 %1184, %v1108
          %v1186 = vpop.permute.xlu0 %1185
          %1187 = vset.pattern.permute.xlu0 0
          %1188 = vperm.xlu0 %1187, %v1109
          %v1189 = vpop.permute.xlu0 %1188
          %1190 = vset.pattern.permute.xlu0 0
          %1191 = vperm.xlu0 %1190, %v1110
          %v1192 = vpop.permute.xlu0 %1191
          %1193 = vset.pattern.permute.xlu0 0
          %1194 = vperm.xlu0 %1193, %v1111
          %v1195 = vpop.permute.xlu0 %1194
          %1196 = vset.pattern.permute.xlu0 0
          %1197 = vperm.xlu0 %1196, %v1112
          %v1198 = vpop.permute.xlu0 %1197
          %1199 = vset.pattern.permute.xlu0 0
          %1200 = vperm.xlu0 %1199, %v1113
          %v1201 = vpop.permute.xlu0 %1200
          %1202 = vset.pattern.permute.xlu0 0
          %1203 = vperm.xlu0 %1202, %v1114
          %v1204 = vpop.permute.xlu0 %1203
          %1205 = vset.pattern.permute.xlu0 0
          %1206 = vperm.xlu0 %1205, %v1115
          %v1207 = vpop.permute.xlu0 %1206
          %1208 = vset.pattern.permute.xlu0 0
          %1209 = vperm.xlu0 %1208, %v1116
          %v1210 = vpop.permute.xlu0 %1209
          %1211 = vset.pattern.permute.xlu0 0
          %1212 = vperm.xlu0 %1211, %v1117
          %v1213 = vpop.permute.xlu0 %1212
          %1214 = vset.pattern.permute.xlu0 0
          %1215 = vperm.xlu0 %1214, %v1118
          %v1216 = vpop.permute.xlu0 %1215
          %1217 = vset.pattern.permute.xlu0 0
          %1218 = vperm.xlu0 %1217, %v1119
          %v1219 = vpop.permute.xlu0 %1218
          %1220 = vset.pattern.permute.xlu0 0
          %1221 = vperm.xlu0 %1220, %v1120
          %v1222 = vpop.permute.xlu0 %1221
          %1223 = vset.pattern.permute.xlu0 0
          %1224 = vperm.xlu0 %1223, %v1121
          %v1225 = vpop.permute.xlu0 %1224
          %1226 = vset.pattern.permute.xlu0 0
          %1227 = vperm.xlu0 %1226, %v1122
          %v1228 = vpop.permute.xlu0 %1227
          %1229 = vset.pattern.permute.xlu0 0
          %1230 = vperm.xlu0 %1229, %v1123
          %v1231 = vpop.permute.xlu0 %1230
          %1232 = vset.pattern.permute.xlu0 0
          %1233 = vperm.xlu0 %1232, %v1124
          %v1234 = vpop.permute.xlu0 %1233
          %1235 = vset.pattern.permute.xlu0 0
          %1236 = vperm.xlu0 %1235, %v1125
          %v1237 = vpop.permute.xlu0 %1236
          %1238 = vset.pattern.permute.xlu0 0
          %1239 = vperm.xlu0 %1238, %v1126
          %v1240 = vpop.permute.xlu0 %1239
          %1241 = vset.pattern.permute.xlu0 0
          %1242 = vperm.xlu0 %1241, %v1127
          %v1243 = vpop.permute.xlu0 %1242
          %1244 = vset.pattern.permute.xlu0 0
          %1245 = vperm.xlu0 %1244, %v1128
          %v1246 = vpop.permute.xlu0 %1245
          %1247 = vset.pattern.permute.xlu0 0
          %1248 = vperm.xlu0 %1247, %v1129
          %v1249 = vpop.permute.xlu0 %1248
          %1250 = vset.pattern.permute.xlu0 0
          %1251 = vperm.xlu0 %1250, %v1130
          %v1252 = vpop.permute.xlu0 %1251
          %1253 = vset.pattern.permute.xlu0 0
          %1254 = vperm.xlu0 %1253, %v1131
          %v1255 = vpop.permute.xlu0 %1254
          %1256 = vset.pattern.permute.xlu0 0
          %1257 = vperm.xlu0 %1256, %v1132
          %v1258 = vpop.permute.xlu0 %1257
          %1259 = vset.pattern.permute.xlu0 0
          %1260 = vperm.xlu0 %1259, %v1133
          %v1261 = vpop.permute.xlu0 %1260
          %1262 = vset.pattern.permute.xlu0 0
          %1263 = vperm.xlu0 %1262, %v1134
          %v1264 = vpop.permute.xlu0 %1263
          %1265 = vset.pattern.permute.xlu0 0
          %1266 = vperm.xlu0 %1265, %v1135
          %v1267 = vpop.permute.xlu0 %1266
          %1268 = vset.pattern.permute.xlu0 0
          %1269 = vperm.xlu0 %1268, %v1136
          %v1270 = vpop.permute.xlu0 %1269
          %1271 = vset.pattern.permute.xlu0 0
          %1272 = vperm.xlu0 %1271, %v1137
          %v1273 = vpop.permute.xlu0 %1272
          %1274 = vset.pattern.permute.xlu0 0
          %1275 = vperm.xlu0 %1274, %v1138
          %v1276 = vpop.permute.xlu0 %1275
          %1277 = vset.pattern.permute.xlu0 0
          %1278 = vperm.xlu0 %1277, %v1139
          %v1279 = vpop.permute.xlu0 %1278
          %1280 = vset.pattern.permute.xlu0 0
          %1281 = vperm.xlu0 %1280, %v1140
          %v1282 = vpop.permute.xlu0 %1281
          %1283 = vset.pattern.permute.xlu0 0
          %1284 = vperm.xlu0 %1283, %v1141
          %v1285 = vpop.permute.xlu0 %1284
          %1286 = vset.pattern.permute.xlu0 0
          %1287 = vperm.xlu0 %1286, %v1142
          %v1288 = vpop.permute.xlu0 %1287
          %1289 = vset.pattern.permute.xlu0 0
          %1290 = vperm.xlu0 %1289, %v1143
          %v1291 = vpop.permute.xlu0 %1290
          %1292 = vset.pattern.permute.xlu0 0
          %1293 = vperm.xlu0 %1292, %v1144
          %v1294 = vpop.permute.xlu0 %1293
          %1295 = vset.pattern.permute.xlu0 0
          %1296 = vperm.xlu0 %1295, %v1145
          %v1297 = vpop.permute.xlu0 %1296
          %1298 = vset.pattern.permute.xlu0 0
          %1299 = vperm.xlu0 %1298, %v1146
          %v1300 = vpop.permute.xlu0 %1299
          %1301 = vset.pattern.permute.xlu0 0
          %1302 = vperm.xlu0 %1301, %v1147
          %v1303 = vpop.permute.xlu0 %1302
          %1304 = vset.pattern.permute.xlu0 0
          %1305 = vperm.xlu0 %1304, %v1148
          %v1306 = vpop.permute.xlu0 %1305
          %1307 = vset.pattern.permute.xlu0 0
          %1308 = vperm.xlu0 %1307, %v1149
          %v1309 = vpop.permute.xlu0 %1308
          %1310 = vset.pattern.permute.xlu0 0
          %1311 = vperm.xlu0 %1310, %v1150
          %v1312 = vpop.permute.xlu0 %1311
          %1313 = vset.pattern.permute.xlu0 0
          %1314 = vperm.xlu0 %1313, %v1151
          %v1315 = vpop.permute.xlu0 %1314
          %1316 = vset.pattern.permute.xlu0 0
          %1317 = vperm.xlu0 %1316, %v1152
          %v1318 = vpop.permute.xlu0 %1317
          %1319 = vset.pattern.permute.xlu0 0
          %1320 = vperm.xlu0 %1319, %v1153
          %v1321 = vpop.permute.xlu0 %1320
          %1322 = vset.pattern.permute.xlu0 0
          %1323 = vperm.xlu0 %1322, %v1154
          %v1324 = vpop.permute.xlu0 %1323
          %1325 = vset.pattern.permute.xlu0 0
          %1326 = vperm.xlu0 %1325, %v1155
          %v1327 = vpop.permute.xlu0 %1326
          %1328 = vset.pattern.permute.xlu0 0
          %1329 = vperm.xlu0 %1328, %v1156
          %v1330 = vpop.permute.xlu0 %1329
          %1331 = vset.pattern.permute.xlu0 0
          %1332 = vperm.xlu0 %1331, %v1157
          %v1333 = vpop.permute.xlu0 %1332
          %1334 = vset.pattern.permute.xlu0 0
          %1335 = vperm.xlu0 %1334, %v1158
          %v1336 = vpop.permute.xlu0 %1335
          %1337 = vset.pattern.permute.xlu0 0
          %1338 = vperm.xlu0 %1337, %v1159
          %v1339 = vpop.permute.xlu0 %1338
          %1340 = vset.pattern.permute.xlu0 0
          %1341 = vperm.xlu0 %1340, %v1160
          %v1342 = vpop.permute.xlu0 %1341
          %1343 = vset.pattern.permute.xlu0 0
          %1344 = vperm.xlu0 %1343, %v1161
          %v1345 = vpop.permute.xlu0 %1344
          %1346 = vset.pattern.permute.xlu0 0
          %1347 = vperm.xlu0 %1346, %v1162
          %v1348 = vpop.permute.xlu0 %1347
          %1349 = vset.pattern.permute.xlu0 0
          %1350 = vperm.xlu0 %1349, %v1163
          %v1351 = vpop.permute.xlu0 %1350
          %1352 = vset.pattern.permute.xlu0 0
          %1353 = vperm.xlu0 %1352, %v1164
          %v1354 = vpop.permute.xlu0 %1353
          %1355 = vset.pattern.permute.xlu0 0
          %1356 = vperm.xlu0 %1355, %v1165
          %v1357 = vpop.permute.xlu0 %1356
          %vm1358 = vcmp.eq.s32.totalorder %v1168, 1
          %vm1359 = vcmp.eq.s32.totalorder %v1171, 1
          %vm1360 = vcmp.eq.s32.totalorder %v1174, 1
          %vm1361 = vcmp.eq.s32.totalorder %v1177, 1
          %vm1362 = vcmp.eq.s32.totalorder %v1180, 1
          %vm1363 = vcmp.eq.s32.totalorder %v1183, 1
          %vm1364 = vcmp.eq.s32.totalorder %v1186, 1
          %vm1365 = vcmp.eq.s32.totalorder %v1189, 1
          %vm1366 = vcmp.eq.s32.totalorder %v1192, 1
          %vm1367 = vcmp.eq.s32.totalorder %v1195, 1
          %vm1368 = vcmp.eq.s32.totalorder %v1198, 1
          %vm1369 = vcmp.eq.s32.totalorder %v1201, 1
          %vm1370 = vcmp.eq.s32.totalorder %v1204, 1
          %vm1371 = vcmp.eq.s32.totalorder %v1207, 1
          %vm1372 = vcmp.eq.s32.totalorder %v1210, 1
          %vm1373 = vcmp.eq.s32.totalorder %v1213, 1
          %vm1374 = vcmp.eq.s32.totalorder %v1216, 1
          %vm1375 = vcmp.eq.s32.totalorder %v1219, 1
          %vm1376 = vcmp.eq.s32.totalorder %v1222, 1
          %vm1377 = vcmp.eq.s32.totalorder %v1225, 1
          %vm1378 = vcmp.eq.s32.totalorder %v1228, 1
          %vm1379 = vcmp.eq.s32.totalorder %v1231, 1
          %vm1380 = vcmp.eq.s32.totalorder %v1234, 1
          %vm1381 = vcmp.eq.s32.totalorder %v1237, 1
          %vm1382 = vcmp.eq.s32.totalorder %v1240, 1
          %vm1383 = vcmp.eq.s32.totalorder %v1243, 1
          %vm1384 = vcmp.eq.s32.totalorder %v1246, 1
          %vm1385 = vcmp.eq.s32.totalorder %v1249, 1
          %vm1386 = vcmp.eq.s32.totalorder %v1252, 1
          %vm1387 = vcmp.eq.s32.totalorder %v1255, 1
          %vm1388 = vcmp.eq.s32.totalorder %v1258, 1
          %vm1389 = vcmp.eq.s32.totalorder %v1261, 1
          %vm1390 = vcmp.eq.s32.totalorder %v1264, 1
          %vm1391 = vcmp.eq.s32.totalorder %v1267, 1
          %vm1392 = vcmp.eq.s32.totalorder %v1270, 1
          %vm1393 = vcmp.eq.s32.totalorder %v1273, 1
          %vm1394 = vcmp.eq.s32.totalorder %v1276, 1
          %vm1395 = vcmp.eq.s32.totalorder %v1279, 1
          %vm1396 = vcmp.eq.s32.totalorder %v1282, 1
          %vm1397 = vcmp.eq.s32.totalorder %v1285, 1
          %vm1398 = vcmp.eq.s32.totalorder %v1288, 1
          %vm1399 = vcmp.eq.s32.totalorder %v1291, 1
          %vm1400 = vcmp.eq.s32.totalorder %v1294, 1
          %vm1401 = vcmp.eq.s32.totalorder %v1297, 1
          %vm1402 = vcmp.eq.s32.totalorder %v1300, 1
          %vm1403 = vcmp.eq.s32.totalorder %v1303, 1
          %vm1404 = vcmp.eq.s32.totalorder %v1306, 1
          %vm1405 = vcmp.eq.s32.totalorder %v1309, 1
          %vm1406 = vcmp.eq.s32.totalorder %v1312, 1
          %vm1407 = vcmp.eq.s32.totalorder %v1315, 1
          %vm1408 = vcmp.eq.s32.totalorder %v1318, 1
          %vm1409 = vcmp.eq.s32.totalorder %v1321, 1
          %vm1410 = vcmp.eq.s32.totalorder %v1324, 1
          %vm1411 = vcmp.eq.s32.totalorder %v1327, 1
          %vm1412 = vcmp.eq.s32.totalorder %v1330, 1
          %vm1413 = vcmp.eq.s32.totalorder %v1333, 1
          %vm1414 = vcmp.eq.s32.totalorder %v1336, 1
          %vm1415 = vcmp.eq.s32.totalorder %v1339, 1
          %vm1416 = vcmp.eq.s32.totalorder %v1342, 1
          %vm1417 = vcmp.eq.s32.totalorder %v1345, 1
          %vm1418 = vcmp.eq.s32.totalorder %v1348, 1
          %vm1419 = vcmp.eq.s32.totalorder %v1351, 1
          %vm1420 = vcmp.eq.s32.totalorder %v1354, 1
          %vm1421 = vcmp.eq.s32.totalorder %v1357, 1
          %v1422 = vsel %vm1358, %v926, 0.0
          %v1423 = vsel %vm1359, %v927, 0.0
          %v1424 = vsel %vm1360, %v928, 0.0
          %v1425 = vsel %vm1361, %v929, 0.0
          %v1426 = vsel %vm1362, %v930, 0.0
          %v1427 = vsel %vm1363, %v931, 0.0
          %v1428 = vsel %vm1364, %v932, 0.0
          %v1429 = vsel %vm1365, %v933, 0.0
          %v1430 = vsel %vm1366, %v926, 0.0
          %v1431 = vsel %vm1367, %v927, 0.0
          %v1432 = vsel %vm1368, %v928, 0.0
          %v1433 = vsel %vm1369, %v929, 0.0
          %v1434 = vsel %vm1370, %v930, 0.0
          %v1435 = vsel %vm1371, %v931, 0.0
          %v1436 = vsel %vm1372, %v932, 0.0
          %v1437 = vsel %vm1373, %v933, 0.0
          %v1438 = vsel %vm1374, %v926, 0.0
          %v1439 = vsel %vm1375, %v927, 0.0
          %v1440 = vsel %vm1376, %v928, 0.0
          %v1441 = vsel %vm1377, %v929, 0.0
          %v1442 = vsel %vm1378, %v930, 0.0
          %v1443 = vsel %vm1379, %v931, 0.0
          %v1444 = vsel %vm1380, %v932, 0.0
          %v1445 = vsel %vm1381, %v933, 0.0
          %v1446 = vsel %vm1382, %v926, 0.0
          %v1447 = vsel %vm1383, %v927, 0.0
          %v1448 = vsel %vm1384, %v928, 0.0
          %v1449 = vsel %vm1385, %v929, 0.0
          %v1450 = vsel %vm1386, %v930, 0.0
          %v1451 = vsel %vm1387, %v931, 0.0
          %v1452 = vsel %vm1388, %v932, 0.0
          %v1453 = vsel %vm1389, %v933, 0.0
          %v1454 = vsel %vm1390, %v926, 0.0
          %v1455 = vsel %vm1391, %v927, 0.0
          %v1456 = vsel %vm1392, %v928, 0.0
          %v1457 = vsel %vm1393, %v929, 0.0
          %v1458 = vsel %vm1394, %v930, 0.0
          %v1459 = vsel %vm1395, %v931, 0.0
          %v1460 = vsel %vm1396, %v932, 0.0
          %v1461 = vsel %vm1397, %v933, 0.0
          %v1462 = vsel %vm1398, %v926, 0.0
          %v1463 = vsel %vm1399, %v927, 0.0
          %v1464 = vsel %vm1400, %v928, 0.0
          %v1465 = vsel %vm1401, %v929, 0.0
          %v1466 = vsel %vm1402, %v930, 0.0
          %v1467 = vsel %vm1403, %v931, 0.0
          %v1468 = vsel %vm1404, %v932, 0.0
          %v1469 = vsel %vm1405, %v933, 0.0
          %v1470 = vsel %vm1406, %v926, 0.0
          %v1471 = vsel %vm1407, %v927, 0.0
          %v1472 = vsel %vm1408, %v928, 0.0
          %v1473 = vsel %vm1409, %v929, 0.0
          %v1474 = vsel %vm1410, %v930, 0.0
          %v1475 = vsel %vm1411, %v931, 0.0
          %v1476 = vsel %vm1412, %v932, 0.0
          %v1477 = vsel %vm1413, %v933, 0.0
          %v1478 = vsel %vm1414, %v926, 0.0
          %v1479 = vsel %vm1415, %v927, 0.0
          %v1480 = vsel %vm1416, %v928, 0.0
          %v1481 = vsel %vm1417, %v929, 0.0
          %v1482 = vsel %vm1418, %v930, 0.0
          %v1483 = vsel %vm1419, %v931, 0.0
          %v1484 = vsel %vm1420, %v932, 0.0
          %v1485 = vsel %vm1421, %v933, 0.0
          %v1486 = vsel %vm1020, %v1422, -inf
          %v1487 = vsel %vm1020, %v1423, -inf
          %v1488 = vmax.f32 %v1486, %v1487
          %v1489 = vsel %vm1020, %v1424, -inf
          %v1490 = vmax.f32 %v1488, %v1489
          %v1491 = vsel %vm1020, %v1425, -inf
          %v1492 = vmax.f32 %v1490, %v1491
          %v1493 = vsel %vm1020, %v1426, -inf
          %v1494 = vmax.f32 %v1492, %v1493
          %v1495 = vsel %vm1020, %v1427, -inf
          %v1496 = vmax.f32 %v1494, %v1495
          %v1497 = vsel %vm1020, %v1428, -inf
          %v1498 = vmax.f32 %v1496, %v1497
          %v1499 = vsel %vm1020, %v1429, -inf
          %v1500 = vmax.f32 %v1498, %v1499
          %v1501 = vrot.slane %v1500, 4
          %v1502 = vmax.f32 %v1500, %v1501
          %v1503 = vrot.slane %v1502, 2
          %v1504 = vmax.f32 %v1502, %v1503
          %v1505 = vrot.slane %v1504, 1
          %v1506 = vmax.f32 %v1504, %v1505
          %v1507 = vsel %vm1020, %v1430, -inf
          %v1508 = vsel %vm1020, %v1431, -inf
          %v1509 = vmax.f32 %v1507, %v1508
          %v1510 = vsel %vm1020, %v1432, -inf
          %v1511 = vmax.f32 %v1509, %v1510
          %v1512 = vsel %vm1020, %v1433, -inf
          %v1513 = vmax.f32 %v1511, %v1512
          %v1514 = vsel %vm1020, %v1434, -inf
          %v1515 = vmax.f32 %v1513, %v1514
          %v1516 = vsel %vm1020, %v1435, -inf
          %v1517 = vmax.f32 %v1515, %v1516
          %v1518 = vsel %vm1020, %v1436, -inf
          %v1519 = vmax.f32 %v1517, %v1518
          %v1520 = vsel %vm1020, %v1437, -inf
          %v1521 = vmax.f32 %v1519, %v1520
          %v1522 = vrot.slane %v1521, 4
          %v1523 = vmax.f32 %v1521, %v1522
          %v1524 = vrot.slane %v1523, 2
          %v1525 = vmax.f32 %v1523, %v1524
          %v1526 = vrot.slane %v1525, 1
          %v1527 = vmax.f32 %v1525, %v1526
          %v1528 = vsel %vm1020, %v1438, -inf
          %v1529 = vsel %vm1020, %v1439, -inf
          %v1530 = vmax.f32 %v1528, %v1529
          %v1531 = vsel %vm1020, %v1440, -inf
          %v1532 = vmax.f32 %v1530, %v1531
          %v1533 = vsel %vm1020, %v1441, -inf
          %v1534 = vmax.f32 %v1532, %v1533
          %v1535 = vsel %vm1020, %v1442, -inf
          %v1536 = vmax.f32 %v1534, %v1535
          %v1537 = vsel %vm1020, %v1443, -inf
          %v1538 = vmax.f32 %v1536, %v1537
          %v1539 = vsel %vm1020, %v1444, -inf
          %v1540 = vmax.f32 %v1538, %v1539
          %v1541 = vsel %vm1020, %v1445, -inf
          %v1542 = vmax.f32 %v1540, %v1541
          %v1543 = vrot.slane %v1542, 4
          %v1544 = vmax.f32 %v1542, %v1543
          %v1545 = vrot.slane %v1544, 2
          %v1546 = vmax.f32 %v1544, %v1545
          %v1547 = vrot.slane %v1546, 1
          %v1548 = vmax.f32 %v1546, %v1547
          %v1549 = vsel %vm1020, %v1446, -inf
          %v1550 = vsel %vm1020, %v1447, -inf
          %v1551 = vmax.f32 %v1549, %v1550
          %v1552 = vsel %vm1020, %v1448, -inf
          %v1553 = vmax.f32 %v1551, %v1552
          %v1554 = vsel %vm1020, %v1449, -inf
          %v1555 = vmax.f32 %v1553, %v1554
          %v1556 = vsel %vm1020, %v1450, -inf
          %v1557 = vmax.f32 %v1555, %v1556
          %v1558 = vsel %vm1020, %v1451, -inf
          %v1559 = vmax.f32 %v1557, %v1558
          %v1560 = vsel %vm1020, %v1452, -inf
          %v1561 = vmax.f32 %v1559, %v1560
          %v1562 = vsel %vm1020, %v1453, -inf
          %v1563 = vmax.f32 %v1561, %v1562
          %v1564 = vrot.slane %v1563, 4
          %v1565 = vmax.f32 %v1563, %v1564
          %v1566 = vrot.slane %v1565, 2
          %v1567 = vmax.f32 %v1565, %v1566
          %v1568 = vrot.slane %v1567, 1
          %v1569 = vmax.f32 %v1567, %v1568
          %v1570 = vsel %vm1020, %v1454, -inf
          %v1571 = vsel %vm1020, %v1455, -inf
          %v1572 = vmax.f32 %v1570, %v1571
          %v1573 = vsel %vm1020, %v1456, -inf
          %v1574 = vmax.f32 %v1572, %v1573
          %v1575 = vsel %vm1020, %v1457, -inf
          %v1576 = vmax.f32 %v1574, %v1575
          %v1577 = vsel %vm1020, %v1458, -inf
          %v1578 = vmax.f32 %v1576, %v1577
          %v1579 = vsel %vm1020, %v1459, -inf
          %v1580 = vmax.f32 %v1578, %v1579
          %v1581 = vsel %vm1020, %v1460, -inf
          %v1582 = vmax.f32 %v1580, %v1581
          %v1583 = vsel %vm1020, %v1461, -inf
          %v1584 = vmax.f32 %v1582, %v1583
          %v1585 = vrot.slane %v1584, 4
          %v1586 = vmax.f32 %v1584, %v1585
          %v1587 = vrot.slane %v1586, 2
          %v1588 = vmax.f32 %v1586, %v1587
          %v1589 = vrot.slane %v1588, 1
          %v1590 = vmax.f32 %v1588, %v1589
          %v1591 = vsel %vm1020, %v1462, -inf
          %v1592 = vsel %vm1020, %v1463, -inf
          %v1593 = vmax.f32 %v1591, %v1592
          %v1594 = vsel %vm1020, %v1464, -inf
          %v1595 = vmax.f32 %v1593, %v1594
          %v1596 = vsel %vm1020, %v1465, -inf
          %v1597 = vmax.f32 %v1595, %v1596
          %v1598 = vsel %vm1020, %v1466, -inf
          %v1599 = vmax.f32 %v1597, %v1598
          %v1600 = vsel %vm1020, %v1467, -inf
          %v1601 = vmax.f32 %v1599, %v1600
          %v1602 = vsel %vm1020, %v1468, -inf
          %v1603 = vmax.f32 %v1601, %v1602
          %v1604 = vsel %vm1020, %v1469, -inf
          %v1605 = vmax.f32 %v1603, %v1604
          %v1606 = vrot.slane %v1605, 4
          %v1607 = vmax.f32 %v1605, %v1606
          %v1608 = vrot.slane %v1607, 2
          %v1609 = vmax.f32 %v1607, %v1608
          %v1610 = vrot.slane %v1609, 1
          %v1611 = vmax.f32 %v1609, %v1610
          %v1612 = vsel %vm1020, %v1470, -inf
          %v1613 = vsel %vm1020, %v1471, -inf
          %v1614 = vmax.f32 %v1612, %v1613
          %v1615 = vsel %vm1020, %v1472, -inf
          %v1616 = vmax.f32 %v1614, %v1615
          %v1617 = vsel %vm1020, %v1473, -inf
          %v1618 = vmax.f32 %v1616, %v1617
          %v1619 = vsel %vm1020, %v1474, -inf
          %v1620 = vmax.f32 %v1618, %v1619
          %v1621 = vsel %vm1020, %v1475, -inf
          %v1622 = vmax.f32 %v1620, %v1621
          %v1623 = vsel %vm1020, %v1476, -inf
          %v1624 = vmax.f32 %v1622, %v1623
          %v1625 = vsel %vm1020, %v1477, -inf
          %v1626 = vmax.f32 %v1624, %v1625
          %v1627 = vrot.slane %v1626, 4
          %v1628 = vmax.f32 %v1626, %v1627
          %v1629 = vrot.slane %v1628, 2
          %v1630 = vmax.f32 %v1628, %v1629
          %v1631 = vrot.slane %v1630, 1
          %v1632 = vmax.f32 %v1630, %v1631
          %v1633 = vsel %vm1020, %v1478, -inf
          %v1634 = vsel %vm1020, %v1479, -inf
          %v1635 = vmax.f32 %v1633, %v1634
          %v1636 = vsel %vm1020, %v1480, -inf
          %v1637 = vmax.f32 %v1635, %v1636
          %v1638 = vsel %vm1020, %v1481, -inf
          %v1639 = vmax.f32 %v1637, %v1638
          %v1640 = vsel %vm1020, %v1482, -inf
          %v1641 = vmax.f32 %v1639, %v1640
          %v1642 = vsel %vm1020, %v1483, -inf
          %v1643 = vmax.f32 %v1641, %v1642
          %v1644 = vsel %vm1020, %v1484, -inf
          %v1645 = vmax.f32 %v1643, %v1644
          %v1646 = vsel %vm1020, %v1485, -inf
          %v1647 = vmax.f32 %v1645, %v1646
          %v1648 = vrot.slane %v1647, 4
          %v1649 = vmax.f32 %v1647, %v1648
          %v1650 = vrot.slane %v1649, 2
          %v1651 = vmax.f32 %v1649, %v1650
          %v1652 = vrot.slane %v1651, 1
          %v1653 = vmax.f32 %v1651, %v1652
          %v1654 = vld [vmem:[#allocation5] sm:$0xff]
          %vm1663 = vcmask 1041409
          %v1664 = vsel %vm1663, %v1527, %v1506
          %vm1665 = vcmask 1042434
          %v1666 = vsel %vm1665, %v1548, %v1664
          %vm1667 = vcmask 1043459
          %v1668 = vsel %vm1667, %v1569, %v1666
          %vm1669 = vcmask 1044484
          %v1670 = vsel %vm1669, %v1590, %v1668
          %vm1671 = vcmask 1045509
          %v1672 = vsel %vm1671, %v1611, %v1670
          %vm1673 = vcmask 1046534
          %v1674 = vsel %vm1673, %v1632, %v1672
          %vm1675 = vcmask 1047559
          %v1676 = vsel %vm1675, %v1653, %v1674
          %v1678 = vmax.f32 %v1654, %v1676
          %1679 = vst.msk [vmem:[#allocation5] sm:$0xff] %vm1020, %v1678
          // Predicated region
          $region73: #{tpu_custom_call.1} parent=67 // pred_check
            %p1680 = pneg %p749
          $region74: #{tpu_custom_call.1} parent=67 // pred_check_branch
            %1682 = sbr.rel (%p1680) target = $region76
          $region75: #{tpu_custom_call.1} parent=67 // pred_region
            %v1683 = vld [vmem:[#allocation4] sm:$0xff]
            %v1684 = vld [vmem:[%s7] sm:$0xff]
            %v1685 = vmax.f32 %v1684, 1.0
            %1687 = vset.pattern.permute.xlu0 0
            %1688 = vperm.xlu0 %1687, %v1685
            %v1689 = vpop.permute.xlu0 %1688
            %v1691 = vrcp.pop %v1689
            %v1692 = vmul.f32 %v1683, %v1691
            %v1693 = vld [vmem:[#allocation5] sm:$0xff]
            %v1694 = vadd.f32 %v1693, %v1692
            %1695 = vst.msk [vmem:[#allocation6] sm:$0xff] %vm1020, %v1694
          $region76: #{tpu_custom_call.1} parent=67 // pred_fallthru
            _
        $region68: #{tpu_custom_call.1} parent=51 // pred_fallthru
          _
        // Predicated region
        $region77: #{tpu_custom_call.1} parent=51 // pred_check
          %p1696 = pneg %p244
        $region78: #{tpu_custom_call.1} parent=51 // pred_check_branch
          %1698 = sbr.rel (%p1696) target = $region80
        $region79: #{tpu_custom_call.1} parent=51 // pred_region
          %s1700 = ssub.s32 128, 128
          %1701 = vsyncadd [#allocation7], %s1700
          %s1703 = sshll.u32 [#allocation6], 4
          %s1704 = int_to_ptr.vmem [resolvable:$true] %s1703
          %1706 = dma.vmem_to_hbm [thread:$0]  %s1704, 128, %s8, [#allocation7]
        $region80: #{tpu_custom_call.1} parent=51 // pred_fallthru
          _
        // Predicated region
        $region81: #{tpu_custom_call.1} parent=51 // pred_check
          %p1707 = pneg %p265
        $region82: #{tpu_custom_call.1} parent=51 // pred_check_branch
          %1709 = sbr.rel (%p1707) target = $region84
        $region83: #{tpu_custom_call.1} parent=51 // pred_region
          %s1711 = ssub.s32 32, 32
          %1712 = vsyncadd [#allocation9], %s1711
          %s1714 = sshll.u32 [#allocation8], 4
          %s1715 = int_to_ptr.vmem [resolvable:$true] %s1714
          %1717 = dma.vmem_to_hbm [thread:$0]  %s1715, 32, %s9, [#allocation9]
        $region84: #{tpu_custom_call.1} parent=51 // pred_fallthru
          _
        // Predicated region
        $region85: #{tpu_custom_call.1} parent=51 // pred_check
          %p1718 = pneg %p244
        $region86: #{tpu_custom_call.1} parent=51 // pred_check_branch
          %1720 = sbr.rel (%p1718) target = $region88
        $region87: #{tpu_custom_call.1} parent=51 // pred_region
          %1721 = dma.done [#allocation7], 128
        $region88: #{tpu_custom_call.1} parent=51 // pred_fallthru
          _
        // Predicated region
        $region89: #{tpu_custom_call.1} parent=51 // pred_check
          %p1722 = pneg %p265
        $region90: #{tpu_custom_call.1} parent=51 // pred_check_branch
          %1724 = sbr.rel (%p1722) target = $region92
        $region91: #{tpu_custom_call.1} parent=51 // pred_region
          %1725 = dma.done [#allocation9], 32
        $region92: #{tpu_custom_call.1} parent=51 // pred_fallthru
          _
      $region52: #{tpu_custom_call.1} parent=5 // pred_fallthru
        _
      %p1726 = scmp.le.s32.totalorder 2, %s18
      // Predicated region
      $region93: #{tpu_custom_call.1} parent=5 // pred_check
        %p1727 = pneg %p1726
      $region94: #{tpu_custom_call.1} parent=5 // pred_check_branch
        %1729 = sbr.rel (%p1727) target = $region96
      $region95: #{tpu_custom_call.1} parent=5 // pred_region
        %s1730 = ssub.s32 %s18, 2
      $region96: #{tpu_custom_call.1} parent=5 // pred_fallthru
        _
    $region6: #{tpu_custom_call.1} parent=1 // loop_footer
      %s22 = sadd.s32 1, %s18
    $region7: #{tpu_custom_call.1} parent=1 // loop_footer_branch
      %17 = sbr.rel target = $region3
    $region8: #{tpu_custom_call.1} parent=1 // loop_exit
      _
    %1731 = vsyncpa [#allocation7], 1
    %s1732 = scalar_lea.sflag [#allocation7], 1
    %1733 = vsyncpa %s1732, 1
    %1734 = vsyncpa [#allocation9], 1

</llo_original>
